<compile_context>
chip_gen: v5e
topology: v5e:2x2
jax: 0.10.0
libtpu: 0.0.40
codegen_flags: <defaults>
</compile_context>

<pallas_src>
import functools

import jax
import jax.numpy as jnp
from jax.experimental import pallas as pl
from jax.experimental.pallas import tpu as pltpu


def _round_up(x, m):
    return ((x + m - 1) // m) * m


# --------------------------------------------------------------------------------------
# Kernel
# --------------------------------------------------------------------------------------
def sage_layer_kernel(a_ref, hsrc_ref, hdst_ref, scale_ref, w_ref, b_ref, o_ref,
                      acc_ref, z_ref, *, apply_relu: bool, resident_src: bool,
                      tk: int, f_in_pad: int):
    """One (dst-tile i, src-tile k) step of a mean-aggregation SAGEConv layer."""
    k = pl.program_id(1)

    @pl.when(k == 0)
    def _():
        acc_ref[...] = jnp.zeros_like(acc_ref)
        # Self-features half of the fused [h_dst | neigh] operand (written once per dst tile).
        z_ref[:, :f_in_pad] = hdst_ref[...]

    # Partial aggregation: int8 0/1 adjacency tile -> bf16 for the MXU, f32 accumulation.
    a_tile = a_ref[...].astype(hsrc_ref.dtype)
    if resident_src:
        src_start = pl.multiple_of(k * tk, 128)
        h_src = hsrc_ref[pl.ds(src_start, tk), :]
    else:
        h_src = hsrc_ref[...]
    acc_ref[...] += jnp.dot(a_tile, h_src, preferred_element_type=jnp.float32)

    @pl.when(k == pl.num_programs(1) - 1)
    def _():
        # Exact per-dst-row 1/deg scale (mean aggregation), then the fused self+neighbor
        # projection: one depth-2*F_in matmul against the stacked [W_self; W_neigh].
        neigh = (acc_ref[...] * scale_ref[...]).astype(z_ref.dtype)
        z_ref[:, f_in_pad:] = neigh
        out = jnp.dot(z_ref[...], w_ref[...], preferred_element_type=jnp.float32)
        out = out + b_ref[...]
        if apply_relu:
            out = jnp.maximum(out, 0.0)
        o_ref[...] = out.astype(o_ref.dtype)


# --------------------------------------------------------------------------------------
# Planning: tiles, resident-H decision, VMEM limit
# --------------------------------------------------------------------------------------
def _plan(n, f_in_pad, f_out_pad, budget_bytes=28 << 20):
    """Pick (tm, tk), resident-H flag and vmem_limit. Tiles are power-of-two x 128."""
    n128 = _round_up(n, 128)

    def pow2_tile(cap):
        t = 128
        while t * 2 <= cap:
            t *= 2
        return t

    # dst tile: keep >=2 dst tiles when possible so the "parallel" axis can be split
    # across v7x's two TensorCores; cap raised to 1024 (review: old 256 cap never bound).
    tm = pow2_tile(min(1024, n128 if n128 < 256 else n128 // 2))
    # src tile: cap raised to 2048.
    tk = pow2_tile(min(2048, n128))

    def vmem_bytes(tm_, tk_, resident):
        n_src_pad = _round_up(n, tk_)
        n_h_pad = max(_round_up(n, tm_), n_src_pad)
        b = 2 * tm_ * tk_ * 1                                   # A tile (int8), double-buffered
        b += (2 * n_h_pad * f_in_pad * 2 if resident
              else 2 * tk_ * f_in_pad * 2)                      # src features
        b += 2 * tm_ * f_in_pad * 2                             # dst (self) features
        b += 2 * tm_ * 128 * 4                                  # 1/deg scale (lane-padded)
        b += 2 * (2 * f_in_pad) * f_out_pad * 2                 # stacked weights
        b += 2 * 8 * f_out_pad * 4                              # bias (sublane-padded)
        b += 2 * tm_ * f_out_pad * 4                            # output tile (f32 worst case)
        b += tm_ * f_in_pad * 4                                 # f32 accumulator scratch
        b += tm_ * 2 * f_in_pad * 2                             # fused [hdst|neigh] scratch
        return b

    resident = True
    while vmem_bytes(tm, tk, resident) > budget_bytes:
        if resident:
            resident = False
        elif tk > 128:
            tk //= 2
        elif tm > 128:
            tm //= 2
        else:
            break

    est = vmem_bytes(tm, tk, resident)
    # Derive the limit from actual usage (+headroom); never below the 32 MiB scoped default,
    # never above 48 MiB (safe on v5e/v6e's 128 MiB and v7x's 64 MiB physical VMEM).
    vmem_limit = int(min(max(32 << 20, est * 5 // 4 + (2 << 20)), 48 << 20))
    return tm, tk, resident, vmem_limit


# --------------------------------------------------------------------------------------
# One padded SAGEConv layer
# --------------------------------------------------------------------------------------
def _sage_conv_padded(a_i8, scale, h_pad, w_self, w_neigh, bias, *, apply_relu,
                      out_dtype, tm, tk, resident_src, vmem_limit):
    n_dst_pad, n_src_pad = a_i8.shape
    n_h_pad, f_in_pad = h_pad.shape
    f_in, f_out = w_self.shape
    f_out_pad = _round_up(f_out, 128)

    # Stacked weights [W_self; W_neigh] and bias, zero-padded (exact: padded feature columns
    # of H hit zero weight rows; padded output columns get zero weight cols + zero bias).
    w = jnp.zeros((2 * f_in_pad, f_out_pad), jnp.bfloat16)
    w = w.at[:f_in, :f_out].set(w_self.astype(jnp.bfloat16))
    w = w.at[f_in_pad:f_in_pad + f_in, :f_out].set(w_neigh.astype(jnp.bfloat16))
    b_p = jnp.zeros((1, f_out_pad), jnp.float32).at[0, :f_out].set(
        bias.astype(jnp.float32))

    grid = (n_dst_pad // tm, n_src_pad // tk)

    if resident_src:
        # Full-array resident block: H_src is DMA'd to VMEM exactly once.
        hsrc_spec = pl.BlockSpec((n_h_pad, f_in_pad), lambda i, k: (0, 0))
    else:
        hsrc_spec = pl.BlockSpec((tk, f_in_pad), lambda i, k: (k, 0))

    flops = (2 * n_dst_pad * n_src_pad * f_in_pad
             + 2 * n_dst_pad * (2 * f_in_pad) * f_out_pad)
    h_src_bytes = (n_h_pad * f_in_pad * 2 if resident_src
                   else grid[0] * n_src_pad * f_in_pad * 2)   # re-stream factor when tiled
    bytes_accessed = int(
        n_dst_pad * n_src_pad * 1                # int8 adjacency
        + h_src_bytes                            # src features
        + n_dst_pad * f_in_pad * 2               # dst (self) features
        + n_dst_pad * 4                          # 1/deg scale
        + (2 * f_in_pad) * f_out_pad * 2         # stacked weights
        + f_out_pad * 4                          # bias
        + n_dst_pad * f_out_pad * jnp.dtype(out_dtype).itemsize)

    kern = functools.partial(sage_layer_kernel, apply_relu=apply_relu,
                             resident_src=resident_src, tk=tk, f_in_pad=f_in_pad)
    out = pl.pallas_call(
        kern,
        out_shape=jax.ShapeDtypeStruct((n_dst_pad, f_out_pad), out_dtype),
        grid_spec=pltpu.PrefetchScalarGridSpec(
            num_scalar_prefetch=0,
            grid=grid,
            in_specs=[
                pl.BlockSpec((tm, tk), lambda i, k: (i, k)),                   # int8 adjacency
                hsrc_spec,                                                     # src features
                pl.BlockSpec((tm, f_in_pad), lambda i, k: (i, 0)),             # dst features
                pl.BlockSpec((tm, 1), lambda i, k: (i, 0)),                    # 1/deg scale
                pl.BlockSpec((2 * f_in_pad, f_out_pad), lambda i, k: (0, 0)),  # [W_self; W_neigh]
                pl.BlockSpec((1, f_out_pad), lambda i, k: (0, 0)),             # bias
            ],
            out_specs=pl.BlockSpec((tm, f_out_pad), lambda i, k: (i, 0)),
            scratch_shapes=[
                pltpu.VMEM((tm, f_in_pad), jnp.float32),       # aggregation accumulator
                pltpu.VMEM((tm, 2 * f_in_pad), jnp.bfloat16),  # fused [h_dst | neigh] operand
            ],
        ),
        compiler_params=pltpu.CompilerParams(
            dimension_semantics=("parallel", "arbitrary"),
            vmem_limit_bytes=vmem_limit,
        ),
        cost_estimate=pl.CostEstimate(
            flops=int(flops), transcendentals=0, bytes_accessed=bytes_accessed),
    )(a_i8, h_pad, h_pad, scale, w, b_p)
    return out


# --------------------------------------------------------------------------------------
# Block preparation (hoisted out of the layer loop) and full forward pass
# --------------------------------------------------------------------------------------
def _prepare_block(adj, n, n_dst_pad, n_src_pad):
    """0/1 int8 padded adjacency + exact f32 per-dst-row 1/deg scale (0 for isolated nodes)."""
    edges = (adj != 0)
    a_i8 = jnp.zeros((n_dst_pad, n_src_pad), jnp.int8).at[:n, :n].set(
        edges.astype(jnp.int8))
    deg = jnp.sum(edges, axis=1).astype(jnp.float32)
    inv_deg = jnp.where(deg > 0, 1.0 / jnp.maximum(deg, 1.0), 0.0)
    scale = jnp.zeros((n_dst_pad, 1), jnp.float32).at[:n, 0].set(inv_deg)
    return a_i8, scale


def sage_forward(adj_blocks, x, params):
    """SAGE.forward: h = x; for each layer: h = SAGEConv_mean(block, h); ReLU except last."""
    n, f0 = x.shape
    n_layers = len(params)
    assert len(adj_blocks) == n_layers

    f_in_pads = [_round_up(p[0].shape[0], 128) for p in params]
    f_out_pads = [_round_up(p[0].shape[1], 128) for p in params]
    tm, tk, resident_src, vmem_limit = _plan(n, max(f_in_pads), max(f_out_pads))

    n_dst_pad = _round_up(n, tm)
    n_src_pad = _round_up(n, tk)
    n_h_pad = max(n_dst_pad, n_src_pad)

    # Pad / quantize each *distinct* graph block exactly once (reused across layers).
    prepared = {}
    prep_blocks = []
    for blk in adj_blocks:
        key = id(blk)
        if key not in prepared:
            prepared[key] = _prepare_block(blk, n, n_dst_pad, n_src_pad)
        prep_blocks.append(prepared[key])

    # Initial node features: pad + cast to bf16 once (padded rows/cols are zero -> exact).
    f_in0_pad = _round_up(f0, 128)
    h = jnp.zeros((n_h_pad, f_in0_pad), jnp.bfloat16).at[:n, :f0].set(
        x.astype(jnp.bfloat16))

    for il, ((w_self, w_neigh, b), (a_i8, scale)) in enumerate(zip(params, prep_blocks)):
        last = il == n_layers - 1
        h = _sage_conv_padded(
            a_i8, scale, h, w_self, w_neigh, b,
            apply_relu=not last,
            out_dtype=jnp.float32 if last else jnp.bfloat16,   # bf16 intermediates
            tm=tm, tk=tk, resident_src=resident_src, vmem_limit=vmem_limit)
        if not last and h.shape[0] < n_h_pad:
            # Padded src rows only ever meet zero adjacency columns, so zero-padding is exact.
            h = jnp.pad(h, ((0, n_h_pad - h.shape[0]), (0, 0)))

    f_out_last = params[-1][0].shape[1]
    return h[:n, :f_out_last]


def sage_reference(adj_blocks, x, params):
    """Pure-JAX f32 reference of the same forward pass (mean aggregation)."""
    h = x
    n_layers = len(params)
    for il, ((w_self, w_neigh, b), adj) in enumerate(zip(params, adj_blocks)):
        a = (adj != 0).astype(jnp.float32)
        deg = jnp.sum(a, axis=1, keepdims=True)
        a_norm = a / jnp.maximum(deg, 1.0)
        neigh = a_norm @ h
        h = h @ w_self + neigh @ w_neigh + b
        if il != n_layers - 1:
            h = jnp.maximum(h, 0.0)
    return h


def init_sage_params(key, in_feats, n_hidden, n_classes, n_layers):
    """Deterministic parameter init matching SAGE.__init__ layer shapes."""
    dims = []
    if n_layers > 1:
        dims.append((in_feats, n_hidden))
        for _ in range(1, n_layers - 1):
            dims.append((n_hidden, n_hidden))
        dims.append((n_hidden, n_classes))
    else:
        dims.append((in_feats, n_classes))

    params = []
    for (fi, fo) in dims:
        key, k1, k2, k3 = jax.random.split(key, 4)
        scale = 1.0 / jnp.sqrt(jnp.float32(fi))
        w_self = jax.random.uniform(k1, (fi, fo), jnp.float32, -scale, scale)
        w_neigh = jax.random.uniform(k2, (fi, fo), jnp.float32, -scale, scale)
        b = jax.random.uniform(k3, (fo,), jnp.float32, -scale, scale)
        params.append((w_self, w_neigh, b))
    return params


if __name__ == "__main__":
    # Small shapes consistent with the module; N deliberately not 128-aligned to
    # exercise independent dst/src padding and a multi-tile grid.
    N = 300
    IN_FEATS = 50
    N_HIDDEN = 128
    N_CLASSES = 10
    N_LAYERS = 3

    key = jax.random.PRNGKey(0)
    kx, ka, kp = jax.random.split(key, 3)

    # Node features.
    x = jax.random.normal(kx, (N, IN_FEATS), jnp.float32)

    # Random graph -> dense 0/1 adjacency; mean aggregation is done inside the kernel
    # (0/1 int8 adjacency + exact per-row 1/deg scale; zero-degree rows aggregate to 0).
    adj = (jax.random.uniform(ka, (N, N)) < 0.1).astype(jnp.float32)

    # Full-neighbor blocks: the same graph object for every layer (prepared once).
    blocks = [adj] * N_LAYERS

    params = init_sage_params(kp, IN_FEATS, N_HIDDEN, N_CLASSES, N_LAYERS)

    out = sage_forward(blocks, x, params)
    out = jax.block_until_ready(out)
    assert out.shape == (N, N_CLASSES), out.shape

    # Check vs f32 reference (kernel uses bf16 matmuls with f32 accumulation).
    ref = sage_reference(blocks, x, params)
    err = float(jnp.max(jnp.abs(out - ref)))
    tol = 1e-1 * max(1.0, float(jnp.max(jnp.abs(ref))))
    assert err < tol, f"max abs error {err} exceeds tol {tol}"

    print("KERNEL_OK")
</pallas_src>

<mosaic_0001>
module attributes {stable_mosaic.version = 11 : i64} {
  func.func @sage_layer_kernel(%arg0: i32, %arg1: i32, %arg2: memref<128x256xi8, #tpu.memory_space<vmem>>, %arg3: memref<512x128xbf16, #tpu.memory_space<vmem>>, %arg4: memref<128x128xbf16, #tpu.memory_space<vmem>>, %arg5: memref<128x1xf32, #tpu.memory_space<vmem>>, %arg6: memref<256x128xbf16, #tpu.memory_space<vmem>>, %arg7: memref<1x128xf32, #tpu.memory_space<vmem>>, %arg8: memref<128x128xbf16, #tpu.memory_space<vmem>>, %arg9: memref<128x128xf32, #tpu.memory_space<vmem>>, %arg10: memref<128x256xbf16, #tpu.memory_space<vmem>>) attributes {dimension_semantics = [#tpu.dimension_semantics<parallel>, #tpu.dimension_semantics<arbitrary>], iteration_bounds = array<i64: 3, 2>, scalar_prefetch = 0 : i64, scratch_operands = 2 : i64, tpu.core_type = #tpu.core_type<tc>, window_params = [{transform_indices = @transform_0, window_bounds = array<i64: 128, 256>}, {pipeline_mode = #tpu.pipeline_mode<synchronous>, transform_indices = @transform_1, window_bounds = array<i64: 512, 128>}, {transform_indices = @transform_2, window_bounds = array<i64: 128, 128>}, {transform_indices = @transform_3, window_bounds = array<i64: 128, 1>}, {pipeline_mode = #tpu.pipeline_mode<synchronous>, transform_indices = @transform_4, window_bounds = array<i64: 256, 128>}, {pipeline_mode = #tpu.pipeline_mode<synchronous>, transform_indices = @transform_5, window_bounds = array<i64: 1, 128>}, {transform_indices = @transform_6, window_bounds = array<i64: 128, 128>}]} {
    %c0_i32 = arith.constant 0 : i32
    %0 = arith.cmpi eq, %arg1, %c0_i32 : i32
    %1 = arith.extui %0 : i1 to i32
    %c0_i32_0 = arith.constant 0 : i32
    %2 = arith.cmpi ne, %1, %c0_i32_0 : i32
    scf.if %2 {
      %cst_8 = arith.constant 0.000000e+00 : f32
      %16 = vector.broadcast %cst_8 : f32 to vector<128x128xf32>
      %c0_9 = arith.constant 0 : index
      %c0_10 = arith.constant 0 : index
      %17 = vector.load %arg9[%c0_9, %c0_10] : memref<128x128xf32, #tpu.memory_space<vmem>>, vector<128x128xf32>
      tpu.vector_store %arg9[%c0_9, %c0_10], %16 {strides = array<i32>} : memref<128x128xf32, #tpu.memory_space<vmem>>, vector<128x128xf32>,
      %c0_11 = arith.constant 0 : index
      %c0_12 = arith.constant 0 : index
      %18 = vector.load %arg4[%c0_11, %c0_12] : memref<128x128xbf16, #tpu.memory_space<vmem>>, vector<128x128xbf16>
      %c0_13 = arith.constant 0 : index
      %c0_14 = arith.constant 0 : index
      %19 = vector.load %arg10[%c0_13, %c0_14] : memref<128x256xbf16, #tpu.memory_space<vmem>>, vector<128x128xbf16>
      tpu.vector_store %arg10[%c0_13, %c0_14], %18 {strides = array<i32>} : memref<128x256xbf16, #tpu.memory_space<vmem>>, vector<128x128xbf16>,
    } else {
    }
    %c0 = arith.constant 0 : index
    %c0_1 = arith.constant 0 : index
    %3 = vector.load %arg2[%c0, %c0_1] : memref<128x256xi8, #tpu.memory_space<vmem>>, vector<128x256xi8>
    %4 = arith.sitofp %3 : vector<128x256xi8> to vector<128x256xbf16>
    %c256_i32 = arith.constant 256 : i32
    %5 = arith.muli %arg1, %c256_i32 : i32
    %6 = tpu.assume_multiple %5, 128 : i32
    %7 = arith.index_cast %6 : i32 to index
    %c0_2 = arith.constant 0 : index
    %8 = vector.load %arg3[%7, %c0_2] : memref<512x128xbf16, #tpu.memory_space<vmem>>, vector<256x128xbf16>
    %c0_3 = arith.constant 0 : index
    %c0_4 = arith.constant 0 : index
    %9 = vector.load %arg9[%c0_3, %c0_4] : memref<128x128xf32, #tpu.memory_space<vmem>>, vector<128x128xf32>
    %cst = arith.constant dense<0.000000e+00> : vector<128x128xf32>
    %10 = tpu.matmul %4, %8, %cst {dimension_numbers = #tpu.dot_dimension_numbers<[1], [0], [0], [1], [0, 0, 1, 1], [], []>} : vector<128x256xbf16>, vector<256x128xbf16>, vector<128x128xf32> -> vector<128x128xf32>
    %11 = arith.addf %9, %10 : vector<128x128xf32>
    %c0_5 = arith.constant 0 : index
    %c0_6 = arith.constant 0 : index
    %12 = vector.load %arg9[%c0_5, %c0_6] : memref<128x128xf32, #tpu.memory_space<vmem>>, vector<128x128xf32>
    tpu.vector_store %arg9[%c0_5, %c0_6], %11 {strides = array<i32>} : memref<128x128xf32, #tpu.memory_space<vmem>>, vector<128x128xf32>,
    %c1_i32 = arith.constant 1 : i32
    %13 = arith.cmpi eq, %arg1, %c1_i32 : i32
    %14 = arith.extui %13 : i1 to i32
    %c0_i32_7 = arith.constant 0 : i32
    %15 = arith.cmpi ne, %14, %c0_i32_7 : i32
    scf.if %15 {
      %c0_8 = arith.constant 0 : index
      %c0_9 = arith.constant 0 : index
      %16 = vector.load %arg9[%c0_8, %c0_9] : memref<128x128xf32, #tpu.memory_space<vmem>>, vector<128x128xf32>
      %c0_10 = arith.constant 0 : index
      %c0_11 = arith.constant 0 : index
      %17 = vector.load %arg5[%c0_10, %c0_11] : memref<128x1xf32, #tpu.memory_space<vmem>>, vector<128x1xf32>
      %18 = vector.broadcast %17 : vector<128x1xf32> to vector<128x128xf32>
      %19 = arith.mulf %16, %18 : vector<128x128xf32>
      %20 = arith.truncf %19 : vector<128x128xf32> to vector<128x128xbf16>
      %c0_12 = arith.constant 0 : index
      %c128 = arith.constant 128 : index
      %21 = vector.load %arg10[%c0_12, %c128] : memref<128x256xbf16, #tpu.memory_space<vmem>>, vector<128x128xbf16>
      tpu.vector_store %arg10[%c0_12, %c128], %20 {strides = array<i32>} : memref<128x256xbf16, #tpu.memory_space<vmem>>, vector<128x128xbf16>,
      %c0_13 = arith.constant 0 : index
      %c0_14 = arith.constant 0 : index
      %22 = vector.load %arg10[%c0_13, %c0_14] : memref<128x256xbf16, #tpu.memory_space<vmem>>, vector<128x256xbf16>
      %c0_15 = arith.constant 0 : index
      %c0_16 = arith.constant 0 : index
      %23 = vector.load %arg6[%c0_15, %c0_16] : memref<256x128xbf16, #tpu.memory_space<vmem>>, vector<256x128xbf16>
      %cst_17 = arith.constant dense<0.000000e+00> : vector<128x128xf32>
      %24 = tpu.matmul %22, %23, %cst_17 {dimension_numbers = #tpu.dot_dimension_numbers<[1], [0], [0], [1], [0, 0, 1, 1], [], []>} : vector<128x256xbf16>, vector<256x128xbf16>, vector<128x128xf32> -> vector<128x128xf32>
      %c0_18 = arith.constant 0 : index
      %c0_19 = arith.constant 0 : index
      %25 = vector.load %arg7[%c0_18, %c0_19] : memref<1x128xf32, #tpu.memory_space<vmem>>, vector<1x128xf32>
      %26 = vector.broadcast %25 : vector<1x128xf32> to vector<128x128xf32>
      %27 = arith.addf %24, %26 : vector<128x128xf32>
      %cst_20 = arith.constant 0.000000e+00 : f32
      %28 = vector.broadcast %cst_20 : f32 to vector<128x128xf32>
      %29 = arith.maximumf %27, %28 : vector<128x128xf32>
      %30 = arith.truncf %29 : vector<128x128xf32> to vector<128x128xbf16>
      %c0_21 = arith.constant 0 : index
      %c0_22 = arith.constant 0 : index
      %31 = vector.load %arg8[%c0_21, %c0_22] : memref<128x128xbf16, #tpu.memory_space<vmem>>, vector<128x128xbf16>
      tpu.vector_store %arg8[%c0_21, %c0_22], %30 {strides = array<i32>} : memref<128x128xbf16, #tpu.memory_space<vmem>>, vector<128x128xbf16>,
    } else {
    }
    return
  }
  func.func @transform_0(%arg0: i32, %arg1: i32) -> (i32, i32) {
    %c0_i32 = arith.constant 0 : i32
    return %arg0, %arg1 : i32, i32
  }
  func.func @transform_1(%arg0: i32, %arg1: i32) -> (i32, i32) {
    %c0_i32 = arith.constant 0 : i32
    %c0_i32_0 = arith.constant 0 : i32
    %c0_i32_1 = arith.constant 0 : i32
    return %c0_i32, %c0_i32_0 : i32, i32
  }
  func.func @transform_2(%arg0: i32, %arg1: i32) -> (i32, i32) {
    %c0_i32 = arith.constant 0 : i32
    %c0_i32_0 = arith.constant 0 : i32
    return %arg0, %c0_i32 : i32, i32
  }
  func.func @transform_3(%arg0: i32, %arg1: i32) -> (i32, i32) {
    %c0_i32 = arith.constant 0 : i32
    %c0_i32_0 = arith.constant 0 : i32
    return %arg0, %c0_i32 : i32, i32
  }
  func.func @transform_4(%arg0: i32, %arg1: i32) -> (i32, i32) {
    %c0_i32 = arith.constant 0 : i32
    %c0_i32_0 = arith.constant 0 : i32
    %c0_i32_1 = arith.constant 0 : i32
    return %c0_i32, %c0_i32_0 : i32, i32
  }
  func.func @transform_5(%arg0: i32, %arg1: i32) -> (i32, i32) {
    %c0_i32 = arith.constant 0 : i32
    %c0_i32_0 = arith.constant 0 : i32
    %c0_i32_1 = arith.constant 0 : i32
    return %c0_i32, %c0_i32_0 : i32, i32
  }
  func.func @transform_6(%arg0: i32, %arg1: i32) -> (i32, i32) {
    %c0_i32 = arith.constant 0 : i32
    %c0_i32_0 = arith.constant 0 : i32
    return %arg0, %c0_i32 : i32, i32
  }
}

</mosaic_0001>

<llo_original>
// kernel: tpu_custom_call.1
$region0: #{tpu_custom_call.1}
  #allocation0 [shape = 'u32[]', space=smem, size = 0x4, offset = 0x4, fixed_abs, tag = 'smem constant byte address 0x4 - core index']
  #allocation1 [shape = 'u32[72,128]{1,0:T(1,128)}', space=vmem, size = 0x9000, scoped, tag = 'internal scratch']
  #allocation2 [shape = 'f32[128,128]{1,0:T(8,128)}', space=vmem, size = 0x10000, scoped, tag = 'scratch operand']
  #allocation3 [shape = 'bf16[128,256]{1,0:T(8,128)(2,1)}', space=vmem, size = 0x10000, scoped, tag = 'scratch operand']
  %s0 = inlined_call_operand.vmem [shape: s8[384,512], index: 0, kind: input, shape index: {}]
  %s1 = inlined_call_operand.hbm [shape: bf16[512,128], index: 1, kind: input, shape index: {}]
  %s2 = inlined_call_operand.hbm [shape: bf16[512,128], index: 2, kind: input, shape index: {}]
  %s3 = inlined_call_operand.vmem [shape: f32[384,1], index: 3, kind: input, shape index: {}]
  %s4 = inlined_call_operand.hbm [shape: bf16[256,128], index: 4, kind: input, shape index: {}]
  %s5 = inlined_call_operand.vmem [shape: f32[1,128], index: 5, kind: input, shape index: {}]
  %s6 = inlined_call_operand.hbm [shape: bf16[384,128], index: 6, kind: output, shape index: {}]
  %s7 = sld [smem:[#allocation0]]
  $region100: #{tpu_custom_call.1} parent=0
    _
  %s9 = ssub.s32 1, %s7
  %s10 = scalar_select 0, %s9, %s7
  $region1: #{tpu_custom_call.1} parent=0
    #allocation4 [shape = 'u8[65536]{0}', space=vmem, size = 0x10000, scoped, tag = 'input window, operand 0']
    #allocation5 [shape = 'u8[131072]{0}', space=vmem, size = 0x20000, scoped, tag = 'input window, operand 1, single buffered']
    #allocation6 [shape = 's32[2]{0}', space=sflag, size = 0x8, scoped, tag = 'scoped memory for tpu_custom_call.1']
    #allocation7 [shape = 's32[2]{0}', space=sflag, size = 0x8, scoped, tag = 'scoped memory for tpu_custom_call.1']
    #allocation8 [shape = 'u8[65536]{0}', space=vmem, size = 0x10000, scoped, tag = 'input window, operand 2']
    #allocation9 [shape = 's32[2]{0}', space=sflag, size = 0x8, scoped, tag = 'scoped memory for tpu_custom_call.1']
    #allocation10 [shape = 'u8[65536]{0}', space=vmem, size = 0x10000, scoped, tag = 'input window, operand 4, single buffered']
    #allocation11 [shape = 'u8[65536]{0}', space=vmem, size = 0x10000, scoped, tag = 'output window, operand 0']
    %11 = vsyncpa [#allocation6], 0
    %12 = vsyncpa [#allocation9], 0
    %s13 = scalar_lea.sflag [#allocation9], 1
    %14 = vsyncpa %s13, 0
    %15 = vsyncpa [#allocation7], 0
    %s16 = scalar_lea.sflag [#allocation7], 1
    %17 = vsyncpa %s16, 0
    loop: start=0, step=1, limit=8
    $region2: #{tpu_custom_call.1} parent=1 // loop_pre_header
      _
    $region3: #{tpu_custom_call.1} parent=1 // loop_header
      %s19 = sphi 0, %s23
      %p20 = scmp.ge.s32.totalorder %s19, 8
      %s26 = sphi 0, %s38
      %s27 = sphi 0, %s34
      %s28 = sphi 0, %s26
      %s29 = sphi 0, %s27
      %s30 = sphi 0, %s28
      %s31 = sphi 0, %s29
      %s43 = sphi 0, %s45
      %s46 = sphi 0, %s43
      %s47 = sphi 0, %s46
      %s63 = sphi 0, %s47
      %s67 = sphi 0, %s67
      %s69 = sphi 0, %s67
      %s70 = sphi 0, %s69
      %s84 = sphi 0, %s70
      %s90 = sphi 0, %s92
      %s93 = sphi 0, %s90
      %s94 = sphi 0, %s93
      %s110 = sphi 0, %s94
      %s116 = sphi 0, %s118
      %s119 = sphi 0, %s116
      %s120 = sphi 0, %s119
      %s136 = sphi 0, %s120
      %s140 = sphi 0, %s140
      %s142 = sphi 0, %s140
      %s143 = sphi 0, %s142
      %s157 = sphi 0, %s143
      %s161 = sphi 0, %s161
      %s163 = sphi 0, %s161
      %s164 = sphi 0, %s163
      %s178 = sphi 0, %s164
      %s184 = sphi 0, %s186
      %s187 = sphi 0, %s184
      %s188 = sphi 0, %s187
      %s204 = sphi 0, %s188
    $region4: #{tpu_custom_call.1} parent=1 // loop_header_branch
      %22 = sbr.rel (%p20) target = $region8
    $region5: #{tpu_custom_call.1} parent=1 // loop_body
      %s24 = ssub.s32 %s19, 1
      %s25 = ssub.s32 %s19, 2
      %s32 = sadd.s32 1, %s27
      %p33 = scmp.ge.s32.totalorder %s32, 2
      %s34 = scalar_select %p33, 0, %s32
      %s35 = sadd.s32 1, %s26
      %s36 = scalar_select %p33, %s35, %s26
      %p37 = scmp.ge.s32.totalorder %s36, 3
      %s38 = scalar_select %p37, 0, %s36
      %s39 = ssub.s32 %s26, %s38
      %s40 = ssub.s32 %s27, %s34
      %s41 = sor.u32 %s39, %s40
      %p42 = scmp.eq.s32.totalorder %s41, 0
      %s44 = sadd.s32 %s43, 1
      %s45 = scalar_select %p42, %s43, %s44
      %p48 = pneg %p42
      %p49 = scmp.eq.s32.totalorder %s19, 5
      %p50 = por %p48, %p49
      %p51 = scmp.ne.s32.totalorder %s43, %s46
      %p52 = scmp.eq.s32.totalorder %s19, 0
      %p53 = por %p51, %p52
      %p54 = scmp.ne.s32.totalorder %s43, %s46
      %p55 = scmp.eq.s32.totalorder %s24, 5
      %p56 = por %p54, %p55
      %p57 = scmp.ne.s32.totalorder %s46, %s47
      %p58 = scmp.eq.s32.totalorder %s24, 0
      %p59 = por %p57, %p58
      %p60 = scmp.ne.s32.totalorder %s46, %s47
      %p61 = scmp.eq.s32.totalorder %s25, 5
      %p62 = por %p60, %p61
      %p64 = scmp.ne.s32.totalorder %s47, %s63
      %p65 = scmp.eq.s32.totalorder %s25, 0
      %p66 = por %p64, %p65
      %s68 = sadd.s32 %s67, 1
      %p71 = scmp.eq.s32.totalorder %s19, 5
      %p72 = scmp.ne.s32.totalorder %s67, %s69
      %p73 = scmp.eq.s32.totalorder %s19, 0
      %p74 = por %p72, %p73
      %p75 = scmp.ne.s32.totalorder %s67, %s69
      %p76 = scmp.eq.s32.totalorder %s24, 5
      %p77 = por %p75, %p76
      %p78 = scmp.ne.s32.totalorder %s69, %s70
      %p79 = scmp.eq.s32.totalorder %s24, 0
      %p80 = por %p78, %p79
      %p81 = scmp.ne.s32.totalorder %s69, %s70
      %p82 = scmp.eq.s32.totalorder %s25, 5
      %p83 = por %p81, %p82
      %p85 = scmp.ne.s32.totalorder %s70, %s84
      %p86 = scmp.eq.s32.totalorder %s25, 0
      %p87 = por %p85, %p86
      %s88 = ssub.s32 %s26, %s38
      %p89 = scmp.eq.s32.totalorder %s88, 0
      %s91 = sadd.s32 %s90, 1
      %s92 = scalar_select %p89, %s90, %s91
      %p95 = pneg %p89
      %p96 = scmp.eq.s32.totalorder %s19, 5
      %p97 = por %p95, %p96
      %p98 = scmp.ne.s32.totalorder %s90, %s93
      %p99 = scmp.eq.s32.totalorder %s19, 0
      %p100 = por %p98, %p99
      %p101 = scmp.ne.s32.totalorder %s90, %s93
      %p102 = scmp.eq.s32.totalorder %s24, 5
      %p103 = por %p101, %p102
      %p104 = scmp.ne.s32.totalorder %s93, %s94
      %p105 = scmp.eq.s32.totalorder %s24, 0
      %p106 = por %p104, %p105
      %p107 = scmp.ne.s32.totalorder %s93, %s94
      %p108 = scmp.eq.s32.totalorder %s25, 5
      %p109 = por %p107, %p108
      %p111 = scmp.ne.s32.totalorder %s94, %s110
      %p112 = scmp.eq.s32.totalorder %s25, 0
      %p113 = por %p111, %p112
      %s114 = ssub.s32 %s26, %s38
      %p115 = scmp.eq.s32.totalorder %s114, 0
      %s117 = sadd.s32 %s116, 1
      %s118 = scalar_select %p115, %s116, %s117
      %p121 = pneg %p115
      %p122 = scmp.eq.s32.totalorder %s19, 5
      %p123 = por %p121, %p122
      %p124 = scmp.ne.s32.totalorder %s116, %s119
      %p125 = scmp.eq.s32.totalorder %s19, 0
      %p126 = por %p124, %p125
      %p127 = scmp.ne.s32.totalorder %s116, %s119
      %p128 = scmp.eq.s32.totalorder %s24, 5
      %p129 = por %p127, %p128
      %p130 = scmp.ne.s32.totalorder %s119, %s120
      %p131 = scmp.eq.s32.totalorder %s24, 0
      %p132 = por %p130, %p131
      %p133 = scmp.ne.s32.totalorder %s119, %s120
      %p134 = scmp.eq.s32.totalorder %s25, 5
      %p135 = por %p133, %p134
      %p137 = scmp.ne.s32.totalorder %s120, %s136
      %p138 = scmp.eq.s32.totalorder %s25, 0
      %p139 = por %p137, %p138
      %s141 = sadd.s32 %s140, 1
      %p144 = scmp.eq.s32.totalorder %s19, 5
      %p145 = scmp.ne.s32.totalorder %s140, %s142
      %p146 = scmp.eq.s32.totalorder %s19, 0
      %p147 = por %p145, %p146
      %p148 = scmp.ne.s32.totalorder %s140, %s142
      %p149 = scmp.eq.s32.totalorder %s24, 5
      %p150 = por %p148, %p149
      %p151 = scmp.ne.s32.totalorder %s142, %s143
      %p152 = scmp.eq.s32.totalorder %s24, 0
      %p153 = por %p151, %p152
      %p154 = scmp.ne.s32.totalorder %s142, %s143
      %p155 = scmp.eq.s32.totalorder %s25, 5
      %p156 = por %p154, %p155
      %p158 = scmp.ne.s32.totalorder %s143, %s157
      %p159 = scmp.eq.s32.totalorder %s25, 0
      %p160 = por %p158, %p159
      %s162 = sadd.s32 %s161, 1
      %p165 = scmp.eq.s32.totalorder %s19, 5
      %p166 = scmp.ne.s32.totalorder %s161, %s163
      %p167 = scmp.eq.s32.totalorder %s19, 0
      %p168 = por %p166, %p167
      %p169 = scmp.ne.s32.totalorder %s161, %s163
      %p170 = scmp.eq.s32.totalorder %s24, 5
      %p171 = por %p169, %p170
      %p172 = scmp.ne.s32.totalorder %s163, %s164
      %p173 = scmp.eq.s32.totalorder %s24, 0
      %p174 = por %p172, %p173
      %p175 = scmp.ne.s32.totalorder %s163, %s164
      %p176 = scmp.eq.s32.totalorder %s25, 5
      %p177 = por %p175, %p176
      %p179 = scmp.ne.s32.totalorder %s164, %s178
      %p180 = scmp.eq.s32.totalorder %s25, 0
      %p181 = por %p179, %p180
      %s182 = ssub.s32 %s26, %s38
      %p183 = scmp.eq.s32.totalorder %s182, 0
      %s185 = sadd.s32 %s184, 1
      %s186 = scalar_select %p183, %s184, %s185
      %p189 = pneg %p183
      %p190 = scmp.eq.s32.totalorder %s19, 5
      %p191 = por %p189, %p190
      %p192 = scmp.ne.s32.totalorder %s184, %s187
      %p193 = scmp.eq.s32.totalorder %s19, 0
      %p194 = por %p192, %p193
      %p195 = scmp.ne.s32.totalorder %s184, %s187
      %p196 = scmp.eq.s32.totalorder %s24, 5
      %p197 = por %p195, %p196
      %p198 = scmp.ne.s32.totalorder %s187, %s188
      %p199 = scmp.eq.s32.totalorder %s24, 0
      %p200 = por %p198, %p199
      %p201 = scmp.ne.s32.totalorder %s187, %s188
      %p202 = scmp.eq.s32.totalorder %s25, 5
      %p203 = por %p201, %p202
      %p205 = scmp.ne.s32.totalorder %s188, %s204
      %p206 = scmp.eq.s32.totalorder %s25, 0
      %p207 = por %p205, %p206
      %p208 = scmp.le.s32.totalorder 1, %s19
      %p209 = scmp.lt.s32.totalorder %s19, 7
      %p210 = pnand %p208, %p209
      %p211 = pneg %p210
      // Predicated region
      $region9: #{tpu_custom_call.1} parent=5 // pred_check
        _
      $region10: #{tpu_custom_call.1} parent=5 // pred_check_branch
        %213 = sbr.rel (%p210) target = $region12
      $region11: #{tpu_custom_call.1} parent=5 // pred_region
        %s214 = ssub.s32 %s19, 1
        // Predicated region
        $region13: #{tpu_custom_call.1} parent=11 // pred_check
          %p215 = pneg %p80
        $region14: #{tpu_custom_call.1} parent=11 // pred_check_branch
          %217 = sbr.rel (%p215) target = $region16
        $region15: #{tpu_custom_call.1} parent=11 // pred_region
          %219 = vsyncadd [#allocation6], 0
          %s220 = sshll.u32 %s1, 4
          %s221 = int_to_ptr.hbm [resolvable:$true] %s220
          %s222 = sshll.u32 [#allocation5], 4
          %s223 = int_to_ptr.vmem [resolvable:$true] %s222
          %228 = dma.hbm_to_vmem [thread:$0]  %s221, 4096, %s223, [#allocation6], 64, 64, 4
        $region16: #{tpu_custom_call.1} parent=11 // pred_fallthru
          _
        // Predicated region
        $region17: #{tpu_custom_call.1} parent=11 // pred_check
          %p229 = pneg %p153
        $region18: #{tpu_custom_call.1} parent=11 // pred_check_branch
          %231 = sbr.rel (%p229) target = $region20
        $region19: #{tpu_custom_call.1} parent=11 // pred_region
          %233 = vsyncadd [#allocation9], 0
          %s234 = sshll.u32 %s4, 4
          %s235 = int_to_ptr.hbm [resolvable:$true] %s234
          %s236 = sshll.u32 [#allocation10], 4
          %s237 = int_to_ptr.vmem [resolvable:$true] %s236
          %242 = dma.hbm_to_vmem [thread:$0]  %s235, 2048, %s237, [#allocation9], 64, 64, 4
        $region20: #{tpu_custom_call.1} parent=11 // pred_fallthru
          _
        // Predicated region
        $region21: #{tpu_custom_call.1} parent=11 // pred_check
          %p243 = pneg %p174
        $region22: #{tpu_custom_call.1} parent=11 // pred_check_branch
          %245 = sbr.rel (%p243) target = $region24
        $region23: #{tpu_custom_call.1} parent=11 // pred_region
          _
        $region24: #{tpu_custom_call.1} parent=11 // pred_fallthru
          _
      $region12: #{tpu_custom_call.1} parent=5 // pred_fallthru
        _
      %p246 = scmp.lt.s32.totalorder %s19, 6
      // Predicated region
      $region25: #{tpu_custom_call.1} parent=5 // pred_check
        %p247 = pneg %p246
      $region26: #{tpu_custom_call.1} parent=5 // pred_check_branch
        %249 = sbr.rel (%p247) target = $region28
      $region27: #{tpu_custom_call.1} parent=5 // pred_region
        // Predicated region
        $region29: #{tpu_custom_call.1} parent=27 // pred_check
          %p250 = pneg %p53
        $region30: #{tpu_custom_call.1} parent=27 // pred_check_branch
          %252 = sbr.rel (%p250) target = $region32
        $region31: #{tpu_custom_call.1} parent=27 // pred_region
          %s253 = sand.u32 %s43, 1
          %s254 = sand.u32 %s43, 1
          %s255 = smul.addr %s254, 64
          %s256 = scalar_lea.vmem [#allocation4], %s255
          %s257 = smul.u32 4, %s26
          %s258 = smul.u32 2, %s27
          %s259 = smul.addr %s257, 4
          %s260 = sadd.s32 %s258, %s259
          %s261 = smul.addr %s260, 8
          %s262 = scalar_lea.vmem %s0, %s261
          // Predicated region
          $region33: #{tpu_custom_call.1} parent=31 // pred_check
            _
          $region34: #{tpu_custom_call.1} parent=31 // pred_check_branch
            %264 = sbr.rel (0) target = $region36
          $region35: #{tpu_custom_call.1} parent=31 // pred_region
            // Predicated region
            $region37: #{tpu_custom_call.1} parent=35 // pred_check
              _
            $region38: #{tpu_custom_call.1} parent=35 // pred_check_branch
              %266 = sbr.rel (0) target = $region40
            $region39: #{tpu_custom_call.1} parent=35 // pred_region
              loop: start=0, step=1, limit=1
              $region41: #{tpu_custom_call.1} parent=39 // loop_pre_header
                _
              $region42: #{tpu_custom_call.1} parent=39 // loop_header
                %s268 = sphi 0, %s272
                %p269 = scmp.ge.s32.totalorder %s268, 1
                %s273 = sphi %s262, %s262
                %s274 = sphi %s256, %s256
              $region43: #{tpu_custom_call.1} parent=39 // loop_header_branch
                %271 = sbr.rel (%p269) target = $region47
              $region44: #{tpu_custom_call.1} parent=39 // loop_body
                %v275 = vld [vmem:[%s273] sm:$0xff]
                %276 = vst [vmem:[%s274] sm:$0xff] %v275
                %v277 = vld [vmem:[%s273 + $0x8] sm:$0xff]
                %278 = vst [vmem:[%s274 + $0x8] sm:$0xff] %v277
                %v279 = vld [vmem:[%s273 + $0x20] sm:$0xff]
                %280 = vst [vmem:[%s274 + $0x10] sm:$0xff] %v279
                %v281 = vld [vmem:[%s273 + $0x28] sm:$0xff]
                %282 = vst [vmem:[%s274 + $0x18] sm:$0xff] %v281
                %v283 = vld [vmem:[%s273 + $0x40] sm:$0xff]
                %284 = vst [vmem:[%s274 + $0x20] sm:$0xff] %v283
                %v285 = vld [vmem:[%s273 + $0x48] sm:$0xff]
                %286 = vst [vmem:[%s274 + $0x28] sm:$0xff] %v285
                %v287 = vld [vmem:[%s273 + $0x60] sm:$0xff]
                %288 = vst [vmem:[%s274 + $0x30] sm:$0xff] %v287
                %v289 = vld [vmem:[%s273 + $0x68] sm:$0xff]
                %290 = vst [vmem:[%s274 + $0x38] sm:$0xff] %v289
              $region45: #{tpu_custom_call.1} parent=39 // loop_footer
                %s272 = sadd.s32 1, %s268
              $region46: #{tpu_custom_call.1} parent=39 // loop_footer_branch
                %267 = sbr.rel target = $region42
              $region47: #{tpu_custom_call.1} parent=39 // loop_exit
                _
            $region40: #{tpu_custom_call.1} parent=35 // pred_fallthru
              _
            // Predicated region
            $region48: #{tpu_custom_call.1} parent=35 // pred_check
              _
            $region49: #{tpu_custom_call.1} parent=35 // pred_check_branch
              %292 = sbr.rel target = $region51
            $region50: #{tpu_custom_call.1} parent=35 // pred_region
              _
            $region51: #{tpu_custom_call.1} parent=35 // pred_fallthru
              _
          $region36: #{tpu_custom_call.1} parent=31 // pred_fallthru
            _
          %293 = vnop
        $region32: #{tpu_custom_call.1} parent=27 // pred_fallthru
          _
        // Predicated region
        $region52: #{tpu_custom_call.1} parent=27 // pred_check
          %p294 = pneg %p100
        $region53: #{tpu_custom_call.1} parent=27 // pred_check_branch
          %296 = sbr.rel (%p294) target = $region55
        $region54: #{tpu_custom_call.1} parent=27 // pred_region
          %s297 = sand.u32 %s19, 1
          %s298 = scalar_lea.sflag [#allocation9], %s297
          %s299 = sand.u32 %s90, 1
          %s300 = smul.addr %s299, 64
          %s301 = scalar_lea.vmem [#allocation8], %s300
          %s302 = smul.u32 16, %s26
          %304 = vsyncadd %s298, 0
          %s305 = smul.addr %s302, 4
          %s306 = scalar_lea.hbm %s2, %s305
          %s307 = sshll.u32 %s306, 4
          %s308 = int_to_ptr.hbm [resolvable:$true] %s307
          %s309 = sshll.u32 %s301, 4
          %s310 = int_to_ptr.vmem [resolvable:$true] %s309
          %315 = dma.hbm_to_vmem [thread:$0]  %s308, 1024, %s310, %s298, 64, 64, 4
        $region55: #{tpu_custom_call.1} parent=27 // pred_fallthru
          _
        // Predicated region
        $region56: #{tpu_custom_call.1} parent=27 // pred_check
          %p316 = pneg %p126
        $region57: #{tpu_custom_call.1} parent=27 // pred_check_branch
          %318 = sbr.rel (%p316) target = $region59
        $region58: #{tpu_custom_call.1} parent=27 // pred_region
          %s319 = smul.u32 16, %s26
          %p320 = scmp.lt.s32.totalorder %s319, 47
          %s321 = scalar_select %p320, %s319, 47
          %s322 = smul.addr %s321, 8
          %s323 = scalar_lea.vmem %s3, %s322
          %s324 = smul.u32 16, %s26
        $region59: #{tpu_custom_call.1} parent=27 // pred_fallthru
          _
      $region28: #{tpu_custom_call.1} parent=5 // pred_fallthru
        _
      %p325 = scmp.le.s32.totalorder 1, %s19
      %p326 = scmp.lt.s32.totalorder %s19, 7
      %p327 = pnand %p325, %p326
      %p328 = pneg %p327
      // Predicated region
      $region60: #{tpu_custom_call.1} parent=5 // pred_check
        _
      $region61: #{tpu_custom_call.1} parent=5 // pred_check_branch
        %330 = sbr.rel (%p327) target = $region63
      $region62: #{tpu_custom_call.1} parent=5 // pred_region
        %s331 = ssub.s32 %s19, 1
        %s332 = sand.u32 %s46, 1
        %s333 = sand.u32 %s46, 1
        %s334 = smul.addr %s333, 64
        %s335 = scalar_lea.vmem [#allocation4], %s334
        // Predicated region
        $region64: #{tpu_custom_call.1} parent=62 // pred_check
          %p336 = pneg %p59
        $region65: #{tpu_custom_call.1} parent=62 // pred_check_branch
          %338 = sbr.rel (%p336) target = $region67
        $region66: #{tpu_custom_call.1} parent=62 // pred_region
          _
        $region67: #{tpu_custom_call.1} parent=62 // pred_fallthru
          _
        // Predicated region
        $region68: #{tpu_custom_call.1} parent=62 // pred_check
          %p339 = pneg %p80
        $region69: #{tpu_custom_call.1} parent=62 // pred_check_branch
          %341 = sbr.rel (%p339) target = $region71
        $region70: #{tpu_custom_call.1} parent=62 // pred_region
          %343 = dma.done [#allocation6], 4096
        $region71: #{tpu_custom_call.1} parent=62 // pred_fallthru
          _
        %s344 = sand.u32 %s24, 1
        %s345 = scalar_lea.sflag [#allocation9], %s344
        %s346 = sand.u32 %s93, 1
        %s347 = smul.addr %s346, 64
        %s348 = scalar_lea.vmem [#allocation8], %s347
        // Predicated region
        $region72: #{tpu_custom_call.1} parent=62 // pred_check
          %p349 = pneg %p106
        $region73: #{tpu_custom_call.1} parent=62 // pred_check_branch
          %351 = sbr.rel (%p349) target = $region75
        $region74: #{tpu_custom_call.1} parent=62 // pred_region
          %353 = dma.done %s345, 1024
        $region75: #{tpu_custom_call.1} parent=62 // pred_fallthru
          _
        // Predicated region
        $region76: #{tpu_custom_call.1} parent=62 // pred_check
          %p354 = pneg %p153
        $region77: #{tpu_custom_call.1} parent=62 // pred_check_branch
          %356 = sbr.rel (%p354) target = $region79
        $region78: #{tpu_custom_call.1} parent=62 // pred_region
          %358 = dma.done [#allocation9], 2048
        $region79: #{tpu_custom_call.1} parent=62 // pred_fallthru
          _
        %s359 = sand.u32 %s46, 1
        %s360 = sand.u32 %s46, 1
        %s361 = smul.addr %s360, 64
        %s362 = scalar_lea.vmem [#allocation4], %s361
        %p363 = pneg %p59
        %p364 = pneg %p56
        %p365 = pneg %p80
        %p366 = pneg %p77
        %s367 = sand.u32 %s24, 1
        %s368 = scalar_lea.sflag [#allocation9], %s367
        %s369 = sand.u32 %s93, 1
        %s370 = smul.addr %s369, 64
        %s371 = scalar_lea.vmem [#allocation8], %s370
        %p372 = pneg %p106
        %p373 = pneg %p103
        %s374 = smul.u32 16, %s28
        %p375 = scmp.lt.s32.totalorder %s374, 47
        %s376 = scalar_select %p375, %s374, 47
        %s377 = smul.addr %s376, 8
        %s378 = scalar_lea.vmem %s3, %s377
        %p379 = pneg %p132
        %p380 = pneg %p129
        %p381 = pneg %p153
        %p382 = pneg %p150
        %p383 = pneg %p174
        %p384 = pneg %p171
        %p385 = pneg %p200
        %p386 = pneg %p197
        %s387 = sand.u32 %s187, 1
        %s388 = scalar_lea.sflag [#allocation7], %s387
        %s389 = sand.u32 %s187, 1
        %s390 = smul.addr %s389, 64
        %s391 = scalar_lea.vmem [#allocation11], %s390
        %s392 = smul.u32 4, %s28
        %s393 = smul.u32 2, %s29
        %s394 = smul.u32 16, %s28
        %s395 = smul.u32 16, %s28
        %p396 = scmp.lt.s32.totalorder %s395, 47
        %s397 = scalar_select %p396, %s395, 47
        %s398 = smul.addr %s397, 8
        %s399 = scalar_lea.vmem %s3, %s398
        %s400 = smul.u32 16, %s28
        %s401 = smul.u32 16, %s28
        %p402 = scmp.eq.s32.totalorder %s29, 0
        // Predicated region
        $region80: #{tpu_custom_call.1} parent=62 // pred_check
          %p403 = pneg %p402
        $region81: #{tpu_custom_call.1} parent=62 // pred_check_branch
          %405 = sbr.rel (%p403) target = $region83
        $region82: #{tpu_custom_call.1} parent=62 // pred_region
          %406 = vst [vmem:[#allocation2] sm:$0xff] 0.0
          %407 = vst [vmem:[#allocation2 + $0x8] sm:$0xff] 0.0
          %408 = vst [vmem:[#allocation2 + $0x10] sm:$0xff] 0.0
          %409 = vst [vmem:[#allocation2 + $0x18] sm:$0xff] 0.0
          %410 = vst [vmem:[#allocation2 + $0x20] sm:$0xff] 0.0
          %411 = vst [vmem:[#allocation2 + $0x28] sm:$0xff] 0.0
          %412 = vst [vmem:[#allocation2 + $0x30] sm:$0xff] 0.0
          %413 = vst [vmem:[#allocation2 + $0x38] sm:$0xff] 0.0
          %414 = vst [vmem:[#allocation2 + $0x40] sm:$0xff] 0.0
          %415 = vst [vmem:[#allocation2 + $0x48] sm:$0xff] 0.0
          %416 = vst [vmem:[#allocation2 + $0x50] sm:$0xff] 0.0
          %417 = vst [vmem:[#allocation2 + $0x58] sm:$0xff] 0.0
          %418 = vst [vmem:[#allocation2 + $0x60] sm:$0xff] 0.0
          %419 = vst [vmem:[#allocation2 + $0x68] sm:$0xff] 0.0
          %420 = vst [vmem:[#allocation2 + $0x70] sm:$0xff] 0.0
          %421 = vst [vmem:[#allocation2 + $0x78] sm:$0xff] 0.0
          %v422 = vld [vmem:[%s348] sm:$0xf]
          %v423 = vld [vmem:[%s348 + $0x4] sm:$0xf]
          %v424 = vld [vmem:[%s348 + $0x8] sm:$0xf]
          %v425 = vld [vmem:[%s348 + $0xc] sm:$0xf]
          %v426 = vld [vmem:[%s348 + $0x10] sm:$0xf]
          %v427 = vld [vmem:[%s348 + $0x14] sm:$0xf]
          %v428 = vld [vmem:[%s348 + $0x18] sm:$0xf]
          %v429 = vld [vmem:[%s348 + $0x1c] sm:$0xf]
          %v430 = vld [vmem:[%s348 + $0x20] sm:$0xf]
          %v431 = vld [vmem:[%s348 + $0x24] sm:$0xf]
          %v432 = vld [vmem:[%s348 + $0x28] sm:$0xf]
          %v433 = vld [vmem:[%s348 + $0x2c] sm:$0xf]
          %v434 = vld [vmem:[%s348 + $0x30] sm:$0xf]
          %v435 = vld [vmem:[%s348 + $0x34] sm:$0xf]
          %v436 = vld [vmem:[%s348 + $0x38] sm:$0xf]
          %v437 = vld [vmem:[%s348 + $0x3c] sm:$0xf]
          %438 = vst [vmem:[#allocation3] sm:$0xf] %v422
          %439 = vst [vmem:[#allocation3 + $0x8] sm:$0xf] %v423
          %440 = vst [vmem:[#allocation3 + $0x10] sm:$0xf] %v424
          %441 = vst [vmem:[#allocation3 + $0x18] sm:$0xf] %v425
          %442 = vst [vmem:[#allocation3 + $0x20] sm:$0xf] %v426
          %443 = vst [vmem:[#allocation3 + $0x28] sm:$0xf] %v427
          %444 = vst [vmem:[#allocation3 + $0x30] sm:$0xf] %v428
          %445 = vst [vmem:[#allocation3 + $0x38] sm:$0xf] %v429
          %446 = vst [vmem:[#allocation3 + $0x40] sm:$0xf] %v430
          %447 = vst [vmem:[#allocation3 + $0x48] sm:$0xf] %v431
          %448 = vst [vmem:[#allocation3 + $0x50] sm:$0xf] %v432
          %449 = vst [vmem:[#allocation3 + $0x58] sm:$0xf] %v433
          %450 = vst [vmem:[#allocation3 + $0x60] sm:$0xf] %v434
          %451 = vst [vmem:[#allocation3 + $0x68] sm:$0xf] %v435
          %452 = vst [vmem:[#allocation3 + $0x70] sm:$0xf] %v436
          %453 = vst [vmem:[#allocation3 + $0x78] sm:$0xf] %v437
        $region83: #{tpu_custom_call.1} parent=62 // pred_fallthru
          _
        %v454 = vld [vmem:[%s335] sm:$0xff]
        %v455 = vld [vmem:[%s335 + $0x8] sm:$0xff]
        %v456 = vld [vmem:[%s335 + $0x10] sm:$0xff]
        %v457 = vld [vmem:[%s335 + $0x18] sm:$0xff]
        %v458 = vld [vmem:[%s335 + $0x20] sm:$0xff]
        %v459 = vld [vmem:[%s335 + $0x28] sm:$0xff]
        %v460 = vld [vmem:[%s335 + $0x30] sm:$0xff]
        %v461 = vld [vmem:[%s335 + $0x38] sm:$0xff]
        %v462 = vunpack.c.0.s8 %v454
        %v463 = vunpack.c.0.s8 %v455
        %v464 = vunpack.c.1.s8 %v454
        %v465 = vunpack.c.1.s8 %v455
        %v466 = vunpack.c.2.s8 %v454
        %v467 = vunpack.c.2.s8 %v455
        %v468 = vunpack.c.3.s8 %v454
        %v469 = vunpack.c.3.s8 %v455
        %v470 = vunpack.c.0.s8 %v456
        %v471 = vunpack.c.0.s8 %v457
        %v472 = vunpack.c.1.s8 %v456
        %v473 = vunpack.c.1.s8 %v457
        %v474 = vunpack.c.2.s8 %v456
        %v475 = vunpack.c.2.s8 %v457
        %v476 = vunpack.c.3.s8 %v456
        %v477 = vunpack.c.3.s8 %v457
        %v478 = vunpack.c.0.s8 %v458
        %v479 = vunpack.c.0.s8 %v459
        %v480 = vunpack.c.1.s8 %v458
        %v481 = vunpack.c.1.s8 %v459
        %v482 = vunpack.c.2.s8 %v458
        %v483 = vunpack.c.2.s8 %v459
        %v484 = vunpack.c.3.s8 %v458
        %v485 = vunpack.c.3.s8 %v459
        %v486 = vunpack.c.0.s8 %v460
        %v487 = vunpack.c.0.s8 %v461
        %v488 = vunpack.c.1.s8 %v460
        %v489 = vunpack.c.1.s8 %v461
        %v490 = vunpack.c.2.s8 %v460
        %v491 = vunpack.c.2.s8 %v461
        %v492 = vunpack.c.3.s8 %v460
        %v493 = vunpack.c.3.s8 %v461
        %v494 = vcvt.s32.f32 %v462
        %v495 = vcvt.s32.f32 %v463
        %v496 = vcvt.s32.f32 %v464
        %v497 = vcvt.s32.f32 %v465
        %v498 = vcvt.s32.f32 %v466
        %v499 = vcvt.s32.f32 %v467
        %v500 = vcvt.s32.f32 %v468
        %v501 = vcvt.s32.f32 %v469
        %v502 = vcvt.s32.f32 %v470
        %v503 = vcvt.s32.f32 %v471
        %v504 = vcvt.s32.f32 %v472
        %v505 = vcvt.s32.f32 %v473
        %v506 = vcvt.s32.f32 %v474
        %v507 = vcvt.s32.f32 %v475
        %v508 = vcvt.s32.f32 %v476
        %v509 = vcvt.s32.f32 %v477
        %v510 = vcvt.s32.f32 %v478
        %v511 = vcvt.s32.f32 %v479
        %v512 = vcvt.s32.f32 %v480
        %v513 = vcvt.s32.f32 %v481
        %v514 = vcvt.s32.f32 %v482
        %v515 = vcvt.s32.f32 %v483
        %v516 = vcvt.s32.f32 %v484
        %v517 = vcvt.s32.f32 %v485
        %v518 = vcvt.s32.f32 %v486
        %v519 = vcvt.s32.f32 %v487
        %v520 = vcvt.s32.f32 %v488
        %v521 = vcvt.s32.f32 %v489
        %v522 = vcvt.s32.f32 %v490
        %v523 = vcvt.s32.f32 %v491
        %v524 = vcvt.s32.f32 %v492
        %v525 = vcvt.s32.f32 %v493
        %v526 = vpack.c.bf16 %v496, %v494
        %v527 = vpack.c.bf16 %v497, %v495
        %v528 = vpack.c.bf16 %v500, %v498
        %v529 = vpack.c.bf16 %v501, %v499
        %v530 = vpack.c.bf16 %v504, %v502
        %v531 = vpack.c.bf16 %v505, %v503
        %v532 = vpack.c.bf16 %v508, %v506
        %v533 = vpack.c.bf16 %v509, %v507
        %v534 = vpack.c.bf16 %v512, %v510
        %v535 = vpack.c.bf16 %v513, %v511
        %v536 = vpack.c.bf16 %v516, %v514
        %v537 = vpack.c.bf16 %v517, %v515
        %v538 = vpack.c.bf16 %v520, %v518
        %v539 = vpack.c.bf16 %v521, %v519
        %v540 = vpack.c.bf16 %v524, %v522
        %v541 = vpack.c.bf16 %v525, %v523
        %s542 = smul.u32 %s29, 256
        %s543 = sshra.s32 %s542, 3
        %s544 = sand.u32 %s542, 7
        %s545 = smul.addr %s543, 4
        %s546 = scalar_lea.vmem [#allocation5], %s545
        %v547 = vld [vmem:[%s546] sm:$0xf]
        %v548 = vld [vmem:[%s546 + $0x4] sm:$0xf]
        %v549 = vld [vmem:[%s546 + $0x8] sm:$0xf]
        %v550 = vld [vmem:[%s546 + $0xc] sm:$0xf]
        %v551 = vld [vmem:[%s546 + $0x10] sm:$0xf]
        %v552 = vld [vmem:[%s546 + $0x14] sm:$0xf]
        %v553 = vld [vmem:[%s546 + $0x18] sm:$0xf]
        %v554 = vld [vmem:[%s546 + $0x1c] sm:$0xf]
        %v555 = vld [vmem:[%s546 + $0x20] sm:$0xf]
        %v556 = vld [vmem:[%s546 + $0x24] sm:$0xf]
        %v557 = vld [vmem:[%s546 + $0x28] sm:$0xf]
        %v558 = vld [vmem:[%s546 + $0x2c] sm:$0xf]
        %v559 = vld [vmem:[%s546 + $0x30] sm:$0xf]
        %v560 = vld [vmem:[%s546 + $0x34] sm:$0xf]
        %v561 = vld [vmem:[%s546 + $0x38] sm:$0xf]
        %v562 = vld [vmem:[%s546 + $0x3c] sm:$0xf]
        %v563 = vld [vmem:[%s546 + $0x40] sm:$0xf]
        %v564 = vld [vmem:[%s546 + $0x44] sm:$0xf]
        %v565 = vld [vmem:[%s546 + $0x48] sm:$0xf]
        %v566 = vld [vmem:[%s546 + $0x4c] sm:$0xf]
        %v567 = vld [vmem:[%s546 + $0x50] sm:$0xf]
        %v568 = vld [vmem:[%s546 + $0x54] sm:$0xf]
        %v569 = vld [vmem:[%s546 + $0x58] sm:$0xf]
        %v570 = vld [vmem:[%s546 + $0x5c] sm:$0xf]
        %v571 = vld [vmem:[%s546 + $0x60] sm:$0xf]
        %v572 = vld [vmem:[%s546 + $0x64] sm:$0xf]
        %v573 = vld [vmem:[%s546 + $0x68] sm:$0xf]
        %v574 = vld [vmem:[%s546 + $0x6c] sm:$0xf]
        %v575 = vld [vmem:[%s546 + $0x70] sm:$0xf]
        %v576 = vld [vmem:[%s546 + $0x74] sm:$0xf]
        %v577 = vld [vmem:[%s546 + $0x78] sm:$0xf]
        %v578 = vld [vmem:[%s546 + $0x7c] sm:$0xf]
        %v579 = vld [vmem:[#allocation2] sm:$0xff]
        %v580 = vld [vmem:[#allocation2 + $0x8] sm:$0xff]
        %v581 = vld [vmem:[#allocation2 + $0x10] sm:$0xff]
        %v582 = vld [vmem:[#allocation2 + $0x18] sm:$0xff]
        %v583 = vld [vmem:[#allocation2 + $0x20] sm:$0xff]
        %v584 = vld [vmem:[#allocation2 + $0x28] sm:$0xff]
        %v585 = vld [vmem:[#allocation2 + $0x30] sm:$0xff]
        %v586 = vld [vmem:[#allocation2 + $0x38] sm:$0xff]
        %v587 = vld [vmem:[#allocation2 + $0x40] sm:$0xff]
        %v588 = vld [vmem:[#allocation2 + $0x48] sm:$0xff]
        %v589 = vld [vmem:[#allocation2 + $0x50] sm:$0xff]
        %v590 = vld [vmem:[#allocation2 + $0x58] sm:$0xff]
        %v591 = vld [vmem:[#allocation2 + $0x60] sm:$0xff]
        %v592 = vld [vmem:[#allocation2 + $0x68] sm:$0xff]
        %v593 = vld [vmem:[#allocation2 + $0x70] sm:$0xff]
        %v594 = vld [vmem:[#allocation2 + $0x78] sm:$0xff]
        %v627 = vunpack.c.l.b16 %v547
        %v628 = vunpack.c.l.b16 %v548
        %v629 = vunpack.c.l.b16 %v549
        %v630 = vunpack.c.l.b16 %v550
        %v631 = vunpack.c.l.b16 %v551
        %v632 = vunpack.c.l.b16 %v552
        %v633 = vunpack.c.l.b16 %v553
        %v634 = vunpack.c.l.b16 %v554
        %v635 = vunpack.c.l.b16 %v555
        %v636 = vunpack.c.l.b16 %v556
        %v637 = vunpack.c.l.b16 %v557
        %v638 = vunpack.c.l.b16 %v558
        %v639 = vunpack.c.l.b16 %v559
        %v640 = vunpack.c.l.b16 %v560
        %v641 = vunpack.c.l.b16 %v561
        %v642 = vunpack.c.l.b16 %v562
        %v643 = vunpack.c.l.b16 %v563
        %v644 = vunpack.c.l.b16 %v564
        %v645 = vunpack.c.l.b16 %v565
        %v646 = vunpack.c.l.b16 %v566
        %v647 = vunpack.c.l.b16 %v567
        %v648 = vunpack.c.l.b16 %v568
        %v649 = vunpack.c.l.b16 %v569
        %v650 = vunpack.c.l.b16 %v570
        %v651 = vunpack.c.l.b16 %v571
        %v652 = vunpack.c.l.b16 %v572
        %v653 = vunpack.c.l.b16 %v573
        %v654 = vunpack.c.l.b16 %v574
        %v655 = vunpack.c.l.b16 %v575
        %v656 = vunpack.c.l.b16 %v576
        %v657 = vunpack.c.l.b16 %v577
        %v658 = vunpack.c.l.b16 %v578
        %v659 = vpack.c.b16 %v628, %v627
        %v660 = vpack.c.b16 %v630, %v629
        %v661 = vpack.c.b16 %v632, %v631
        %v662 = vpack.c.b16 %v634, %v633
        %v663 = vpack.c.b16 %v636, %v635
        %v664 = vpack.c.b16 %v638, %v637
        %v665 = vpack.c.b16 %v640, %v639
        %v666 = vpack.c.b16 %v642, %v641
        %v667 = vpack.c.b16 %v644, %v643
        %v668 = vpack.c.b16 %v646, %v645
        %v669 = vpack.c.b16 %v648, %v647
        %v670 = vpack.c.b16 %v650, %v649
        %v671 = vpack.c.b16 %v652, %v651
        %v672 = vpack.c.b16 %v654, %v653
        %v673 = vpack.c.b16 %v656, %v655
        %v674 = vpack.c.b16 %v658, %v657
        %691 = vmatpush.bf16.msra.mxu0 %v666
        %692 = vmatpush.bf16.msra.mxu0 %v665
        %693 = vmatpush.bf16.msra.mxu0 %v664
        %694 = vmatpush.bf16.msra.mxu0 %v663
        %695 = vmatpush.bf16.msra.mxu0 %v662
        %696 = vmatpush.bf16.msra.mxu0 %v661
        %697 = vmatpush.bf16.msra.mxu0 %v660
        %698 = vmatpush.bf16.msra.mxu0 %v659
        %699 = vmatmul.bf16.gmra.mxu0 %v526
        %v700 = vpop.f32.mrf.mxu0
        %v701 = vadd.f32 0.0, %v700
        %v702 = vpop.f32.mrf.mxu0
        %v703 = vadd.f32 0.0, %v702
        %704 = vmatmul.bf16.gmra.mxu0 %v528
        %v705 = vpop.f32.mrf.mxu0
        %v706 = vadd.f32 0.0, %v705
        %v707 = vpop.f32.mrf.mxu0
        %v708 = vadd.f32 0.0, %v707
        %709 = vmatmul.bf16.gmra.mxu0 %v530
        %v710 = vpop.f32.mrf.mxu0
        %v711 = vadd.f32 0.0, %v710
        %v712 = vpop.f32.mrf.mxu0
        %v713 = vadd.f32 0.0, %v712
        %714 = vmatmul.bf16.gmra.mxu0 %v532
        %v715 = vpop.f32.mrf.mxu0
        %v716 = vadd.f32 0.0, %v715
        %v717 = vpop.f32.mrf.mxu0
        %v718 = vadd.f32 0.0, %v717
        %719 = vmatmul.bf16.gmra.mxu0 %v534
        %v720 = vpop.f32.mrf.mxu0
        %v721 = vadd.f32 0.0, %v720
        %v722 = vpop.f32.mrf.mxu0
        %v723 = vadd.f32 0.0, %v722
        %724 = vmatmul.bf16.gmra.mxu0 %v536
        %v725 = vpop.f32.mrf.mxu0
        %v726 = vadd.f32 0.0, %v725
        %v727 = vpop.f32.mrf.mxu0
        %v728 = vadd.f32 0.0, %v727
        %729 = vmatmul.bf16.gmra.mxu0 %v538
        %v730 = vpop.f32.mrf.mxu0
        %v731 = vadd.f32 0.0, %v730
        %v732 = vpop.f32.mrf.mxu0
        %v733 = vadd.f32 0.0, %v732
        %734 = vmatmul.bf16.gmra.mxu0 %v540
        %v735 = vpop.f32.mrf.mxu0
        %v736 = vadd.f32 0.0, %v735
        %v737 = vpop.f32.mrf.mxu0
        %v738 = vadd.f32 0.0, %v737
        %739 = vdwg.mxu0
        %740 = vmatpush.bf16.msra.mxu0 %v674
        %741 = vmatpush.bf16.msra.mxu0 %v673
        %742 = vmatpush.bf16.msra.mxu0 %v672
        %743 = vmatpush.bf16.msra.mxu0 %v671
        %744 = vmatpush.bf16.msra.mxu0 %v670
        %745 = vmatpush.bf16.msra.mxu0 %v669
        %746 = vmatpush.bf16.msra.mxu0 %v668
        %747 = vmatpush.bf16.msra.mxu0 %v667
        %748 = vmatmul.bf16.gmra.mxu0 %v527
        %v749 = vpop.f32.mrf.mxu0
        %v750 = vadd.f32 %v701, %v749
        %v751 = vpop.f32.mrf.mxu0
        %v752 = vadd.f32 %v703, %v751
        %753 = vmatmul.bf16.gmra.mxu0 %v529
        %v754 = vpop.f32.mrf.mxu0
        %v755 = vadd.f32 %v706, %v754
        %v756 = vpop.f32.mrf.mxu0
        %v757 = vadd.f32 %v708, %v756
        %758 = vmatmul.bf16.gmra.mxu0 %v531
        %v759 = vpop.f32.mrf.mxu0
        %v760 = vadd.f32 %v711, %v759
        %v761 = vpop.f32.mrf.mxu0
        %v762 = vadd.f32 %v713, %v761
        %763 = vmatmul.bf16.gmra.mxu0 %v533
        %v764 = vpop.f32.mrf.mxu0
        %v765 = vadd.f32 %v716, %v764
        %v766 = vpop.f32.mrf.mxu0
        %v767 = vadd.f32 %v718, %v766
        %768 = vmatmul.bf16.gmra.mxu0 %v535
        %v769 = vpop.f32.mrf.mxu0
        %v770 = vadd.f32 %v721, %v769
        %v771 = vpop.f32.mrf.mxu0
        %v772 = vadd.f32 %v723, %v771
        %773 = vmatmul.bf16.gmra.mxu0 %v537
        %v774 = vpop.f32.mrf.mxu0
        %v775 = vadd.f32 %v726, %v774
        %v776 = vpop.f32.mrf.mxu0
        %v777 = vadd.f32 %v728, %v776
        %778 = vmatmul.bf16.gmra.mxu0 %v539
        %v779 = vpop.f32.mrf.mxu0
        %v780 = vadd.f32 %v731, %v779
        %v781 = vpop.f32.mrf.mxu0
        %v782 = vadd.f32 %v733, %v781
        %783 = vmatmul.bf16.gmra.mxu0 %v541
        %v784 = vpop.f32.mrf.mxu0
        %v785 = vadd.f32 %v736, %v784
        %v786 = vpop.f32.mrf.mxu0
        %v787 = vadd.f32 %v738, %v786
        %788 = vdwg.mxu0
        %v789 = vadd.f32 %v579, %v750
        %v790 = vadd.f32 %v580, %v752
        %v791 = vadd.f32 %v581, %v755
        %v792 = vadd.f32 %v582, %v757
        %v793 = vadd.f32 %v583, %v760
        %v794 = vadd.f32 %v584, %v762
        %v795 = vadd.f32 %v585, %v765
        %v796 = vadd.f32 %v586, %v767
        %v797 = vadd.f32 %v587, %v770
        %v798 = vadd.f32 %v588, %v772
        %v799 = vadd.f32 %v589, %v775
        %v800 = vadd.f32 %v590, %v777
        %v801 = vadd.f32 %v591, %v780
        %v802 = vadd.f32 %v592, %v782
        %v803 = vadd.f32 %v593, %v785
        %v804 = vadd.f32 %v594, %v787
        %805 = vst [vmem:[#allocation2] sm:$0xff] %v789
        %806 = vst [vmem:[#allocation2 + $0x8] sm:$0xff] %v790
        %807 = vst [vmem:[#allocation2 + $0x10] sm:$0xff] %v791
        %808 = vst [vmem:[#allocation2 + $0x18] sm:$0xff] %v792
        %809 = vst [vmem:[#allocation2 + $0x20] sm:$0xff] %v793
        %810 = vst [vmem:[#allocation2 + $0x28] sm:$0xff] %v794
        %811 = vst [vmem:[#allocation2 + $0x30] sm:$0xff] %v795
        %812 = vst [vmem:[#allocation2 + $0x38] sm:$0xff] %v796
        %813 = vst [vmem:[#allocation2 + $0x40] sm:$0xff] %v797
        %814 = vst [vmem:[#allocation2 + $0x48] sm:$0xff] %v798
        %815 = vst [vmem:[#allocation2 + $0x50] sm:$0xff] %v799
        %816 = vst [vmem:[#allocation2 + $0x58] sm:$0xff] %v800
        %817 = vst [vmem:[#allocation2 + $0x60] sm:$0xff] %v801
        %818 = vst [vmem:[#allocation2 + $0x68] sm:$0xff] %v802
        %819 = vst [vmem:[#allocation2 + $0x70] sm:$0xff] %v803
        %820 = vst [vmem:[#allocation2 + $0x78] sm:$0xff] %v804
        %p821 = scmp.eq.s32.totalorder %s29, 1
        // Predicated region
        $region84: #{tpu_custom_call.1} parent=62 // pred_check
          %p822 = pneg %p821
        $region85: #{tpu_custom_call.1} parent=62 // pred_check_branch
          %824 = sbr.rel (%p822) target = $region87
        $region86: #{tpu_custom_call.1} parent=62 // pred_region
          %v825 = vld [vmem:[#allocation2] sm:$0xff]
          %v826 = vld [vmem:[#allocation2 + $0x8] sm:$0xff]
          %v827 = vld [vmem:[#allocation2 + $0x10] sm:$0xff]
          %v828 = vld [vmem:[#allocation2 + $0x18] sm:$0xff]
          %v829 = vld [vmem:[#allocation2 + $0x20] sm:$0xff]
          %v830 = vld [vmem:[#allocation2 + $0x28] sm:$0xff]
          %v831 = vld [vmem:[#allocation2 + $0x30] sm:$0xff]
          %v832 = vld [vmem:[#allocation2 + $0x38] sm:$0xff]
          %v833 = vld [vmem:[#allocation2 + $0x40] sm:$0xff]
          %v834 = vld [vmem:[#allocation2 + $0x48] sm:$0xff]
          %v835 = vld [vmem:[#allocation2 + $0x50] sm:$0xff]
          %v836 = vld [vmem:[#allocation2 + $0x58] sm:$0xff]
          %v837 = vld [vmem:[#allocation2 + $0x60] sm:$0xff]
          %v838 = vld [vmem:[#allocation2 + $0x68] sm:$0xff]
          %v839 = vld [vmem:[#allocation2 + $0x70] sm:$0xff]
          %v840 = vld [vmem:[#allocation2 + $0x78] sm:$0xff]
          %v841 = vld [vmem:[%s399] sm:$0xff]
          %v842 = vld [vmem:[%s399 + $0x8] sm:$0xff]
          %v843 = vld [vmem:[%s399 + $0x10] sm:$0xff]
          %v844 = vld [vmem:[%s399 + $0x18] sm:$0xff]
          %v845 = vld [vmem:[%s399 + $0x20] sm:$0xff]
          %v846 = vld [vmem:[%s399 + $0x28] sm:$0xff]
          %v847 = vld [vmem:[%s399 + $0x30] sm:$0xff]
          %v848 = vld [vmem:[%s399 + $0x38] sm:$0xff]
          %v849 = vld [vmem:[%s399 + $0x40] sm:$0xff]
          %v850 = vld [vmem:[%s399 + $0x48] sm:$0xff]
          %v851 = vld [vmem:[%s399 + $0x50] sm:$0xff]
          %v852 = vld [vmem:[%s399 + $0x58] sm:$0xff]
          %v853 = vld [vmem:[%s399 + $0x60] sm:$0xff]
          %v854 = vld [vmem:[%s399 + $0x68] sm:$0xff]
          %v855 = vld [vmem:[%s399 + $0x70] sm:$0xff]
          %v856 = vld [vmem:[%s399 + $0x78] sm:$0xff]
          %858 = vset.pattern.permute.xlu0 0
          %859 = vperm.xlu0 %858, %v841
          %v860 = vpop.permute.xlu0 %859
          %863 = vset.pattern.permute.xlu0 0
          %864 = vperm.xlu0 %863, %v842
          %v865 = vpop.permute.xlu0 %864
          %868 = vset.pattern.permute.xlu0 0
          %869 = vperm.xlu0 %868, %v843
          %v870 = vpop.permute.xlu0 %869
          %873 = vset.pattern.permute.xlu0 0
          %874 = vperm.xlu0 %873, %v844
          %v875 = vpop.permute.xlu0 %874
          %878 = vset.pattern.permute.xlu0 0
          %879 = vperm.xlu0 %878, %v845
          %v880 = vpop.permute.xlu0 %879
          %883 = vset.pattern.permute.xlu0 0
          %884 = vperm.xlu0 %883, %v846
          %v885 = vpop.permute.xlu0 %884
          %888 = vset.pattern.permute.xlu0 0
          %889 = vperm.xlu0 %888, %v847
          %v890 = vpop.permute.xlu0 %889
          %893 = vset.pattern.permute.xlu0 0
          %894 = vperm.xlu0 %893, %v848
          %v895 = vpop.permute.xlu0 %894
          %898 = vset.pattern.permute.xlu0 0
          %899 = vperm.xlu0 %898, %v849
          %v900 = vpop.permute.xlu0 %899
          %903 = vset.pattern.permute.xlu0 0
          %904 = vperm.xlu0 %903, %v850
          %v905 = vpop.permute.xlu0 %904
          %908 = vset.pattern.permute.xlu0 0
          %909 = vperm.xlu0 %908, %v851
          %v910 = vpop.permute.xlu0 %909
          %913 = vset.pattern.permute.xlu0 0
          %914 = vperm.xlu0 %913, %v852
          %v915 = vpop.permute.xlu0 %914
          %918 = vset.pattern.permute.xlu0 0
          %919 = vperm.xlu0 %918, %v853
          %v920 = vpop.permute.xlu0 %919
          %923 = vset.pattern.permute.xlu0 0
          %924 = vperm.xlu0 %923, %v854
          %v925 = vpop.permute.xlu0 %924
          %928 = vset.pattern.permute.xlu0 0
          %929 = vperm.xlu0 %928, %v855
          %v930 = vpop.permute.xlu0 %929
          %933 = vset.pattern.permute.xlu0 0
          %934 = vperm.xlu0 %933, %v856
          %v935 = vpop.permute.xlu0 %934
          %v937 = vmul.f32 %v825, %v860
          %v938 = vmul.f32 %v826, %v865
          %v939 = vmul.f32 %v827, %v870
          %v940 = vmul.f32 %v828, %v875
          %v941 = vmul.f32 %v829, %v880
          %v942 = vmul.f32 %v830, %v885
          %v943 = vmul.f32 %v831, %v890
          %v944 = vmul.f32 %v832, %v895
          %v945 = vmul.f32 %v833, %v900
          %v946 = vmul.f32 %v834, %v905
          %v947 = vmul.f32 %v835, %v910
          %v948 = vmul.f32 %v836, %v915
          %v949 = vmul.f32 %v837, %v920
          %v950 = vmul.f32 %v838, %v925
          %v951 = vmul.f32 %v839, %v930
          %v952 = vmul.f32 %v840, %v935
          %v953 = vpack.c.bf16 %v937, %v937
          %v954 = vpack.c.bf16 %v938, %v938
          %v955 = vpack.c.bf16 %v939, %v939
          %v956 = vpack.c.bf16 %v940, %v940
          %v957 = vpack.c.bf16 %v941, %v941
          %v958 = vpack.c.bf16 %v942, %v942
          %v959 = vpack.c.bf16 %v943, %v943
          %v960 = vpack.c.bf16 %v944, %v944
          %v961 = vpack.c.bf16 %v945, %v945
          %v962 = vpack.c.bf16 %v946, %v946
          %v963 = vpack.c.bf16 %v947, %v947
          %v964 = vpack.c.bf16 %v948, %v948
          %v965 = vpack.c.bf16 %v949, %v949
          %v966 = vpack.c.bf16 %v950, %v950
          %v967 = vpack.c.bf16 %v951, %v951
          %v968 = vpack.c.bf16 %v952, %v952
          %969 = vst [vmem:[#allocation3 + $0x4] sm:$0xf] %v953
          %970 = vst [vmem:[#allocation3 + $0xc] sm:$0xf] %v954
          %971 = vst [vmem:[#allocation3 + $0x14] sm:$0xf] %v955
          %972 = vst [vmem:[#allocation3 + $0x1c] sm:$0xf] %v956
          %973 = vst [vmem:[#allocation3 + $0x24] sm:$0xf] %v957
          %974 = vst [vmem:[#allocation3 + $0x2c] sm:$0xf] %v958
          %975 = vst [vmem:[#allocation3 + $0x34] sm:$0xf] %v959
          %976 = vst [vmem:[#allocation3 + $0x3c] sm:$0xf] %v960
          %977 = vst [vmem:[#allocation3 + $0x44] sm:$0xf] %v961
          %978 = vst [vmem:[#allocation3 + $0x4c] sm:$0xf] %v962
          %979 = vst [vmem:[#allocation3 + $0x54] sm:$0xf] %v963
          %980 = vst [vmem:[#allocation3 + $0x5c] sm:$0xf] %v964
          %981 = vst [vmem:[#allocation3 + $0x64] sm:$0xf] %v965
          %982 = vst [vmem:[#allocation3 + $0x6c] sm:$0xf] %v966
          %983 = vst [vmem:[#allocation3 + $0x74] sm:$0xf] %v967
          %984 = vst [vmem:[#allocation3 + $0x7c] sm:$0xf] %v968
          %v985 = vld [vmem:[#allocation3] sm:$0xff]
          %v986 = vld [vmem:[#allocation3 + $0x8] sm:$0xff]
          %v987 = vld [vmem:[#allocation3 + $0x10] sm:$0xff]
          %v988 = vld [vmem:[#allocation3 + $0x18] sm:$0xff]
          %v989 = vld [vmem:[#allocation3 + $0x20] sm:$0xff]
          %v990 = vld [vmem:[#allocation3 + $0x28] sm:$0xff]
          %v991 = vld [vmem:[#allocation3 + $0x30] sm:$0xff]
          %v992 = vld [vmem:[#allocation3 + $0x38] sm:$0xff]
          %v993 = vld [vmem:[#allocation3 + $0x40] sm:$0xff]
          %v994 = vld [vmem:[#allocation3 + $0x48] sm:$0xff]
          %v995 = vld [vmem:[#allocation3 + $0x50] sm:$0xff]
          %v996 = vld [vmem:[#allocation3 + $0x58] sm:$0xff]
          %v997 = vld [vmem:[#allocation3 + $0x60] sm:$0xff]
          %v998 = vld [vmem:[#allocation3 + $0x68] sm:$0xff]
          %v999 = vld [vmem:[#allocation3 + $0x70] sm:$0xff]
          %v1000 = vld [vmem:[#allocation3 + $0x78] sm:$0xff]
          %v1001 = vld [vmem:[#allocation10] sm:$0xf]
          %v1002 = vld [vmem:[#allocation10 + $0x4] sm:$0xf]
          %v1003 = vld [vmem:[#allocation10 + $0x8] sm:$0xf]
          %v1004 = vld [vmem:[#allocation10 + $0xc] sm:$0xf]
          %v1005 = vld [vmem:[#allocation10 + $0x10] sm:$0xf]
          %v1006 = vld [vmem:[#allocation10 + $0x14] sm:$0xf]
          %v1007 = vld [vmem:[#allocation10 + $0x18] sm:$0xf]
          %v1008 = vld [vmem:[#allocation10 + $0x1c] sm:$0xf]
          %v1009 = vld [vmem:[#allocation10 + $0x20] sm:$0xf]
          %v1010 = vld [vmem:[#allocation10 + $0x24] sm:$0xf]
          %v1011 = vld [vmem:[#allocation10 + $0x28] sm:$0xf]
          %v1012 = vld [vmem:[#allocation10 + $0x2c] sm:$0xf]
          %v1013 = vld [vmem:[#allocation10 + $0x30] sm:$0xf]
          %v1014 = vld [vmem:[#allocation10 + $0x34] sm:$0xf]
          %v1015 = vld [vmem:[#allocation10 + $0x38] sm:$0xf]
          %v1016 = vld [vmem:[#allocation10 + $0x3c] sm:$0xf]
          %v1017 = vld [vmem:[#allocation10 + $0x40] sm:$0xf]
          %v1018 = vld [vmem:[#allocation10 + $0x44] sm:$0xf]
          %v1019 = vld [vmem:[#allocation10 + $0x48] sm:$0xf]
          %v1020 = vld [vmem:[#allocation10 + $0x4c] sm:$0xf]
          %v1021 = vld [vmem:[#allocation10 + $0x50] sm:$0xf]
          %v1022 = vld [vmem:[#allocation10 + $0x54] sm:$0xf]
          %v1023 = vld [vmem:[#allocation10 + $0x58] sm:$0xf]
          %v1024 = vld [vmem:[#allocation10 + $0x5c] sm:$0xf]
          %v1025 = vld [vmem:[#allocation10 + $0x60] sm:$0xf]
          %v1026 = vld [vmem:[#allocation10 + $0x64] sm:$0xf]
          %v1027 = vld [vmem:[#allocation10 + $0x68] sm:$0xf]
          %v1028 = vld [vmem:[#allocation10 + $0x6c] sm:$0xf]
          %v1029 = vld [vmem:[#allocation10 + $0x70] sm:$0xf]
          %v1030 = vld [vmem:[#allocation10 + $0x74] sm:$0xf]
          %v1031 = vld [vmem:[#allocation10 + $0x78] sm:$0xf]
          %v1032 = vld [vmem:[#allocation10 + $0x7c] sm:$0xf]
          %v1033 = vld [vmem:[%s5] sm:$0x1]
          %v1035 = vperm.slane %v1033, 0
          %v1053 = vunpack.c.l.b16 %v985
          %v1054 = vunpack.c.h.b16 %v985
          %v1055 = vunpack.c.l.b16 %v986
          %v1056 = vunpack.c.h.b16 %v986
          %v1057 = vunpack.c.l.b16 %v987
          %v1058 = vunpack.c.h.b16 %v987
          %v1059 = vunpack.c.l.b16 %v988
          %v1060 = vunpack.c.h.b16 %v988
          %v1061 = vunpack.c.l.b16 %v989
          %v1062 = vunpack.c.h.b16 %v989
          %v1063 = vunpack.c.l.b16 %v990
          %v1064 = vunpack.c.h.b16 %v990
          %v1065 = vunpack.c.l.b16 %v991
          %v1066 = vunpack.c.h.b16 %v991
          %v1067 = vunpack.c.l.b16 %v992
          %v1068 = vunpack.c.h.b16 %v992
          %v1069 = vunpack.c.l.b16 %v993
          %v1070 = vunpack.c.h.b16 %v993
          %v1071 = vunpack.c.l.b16 %v994
          %v1072 = vunpack.c.h.b16 %v994
          %v1073 = vunpack.c.l.b16 %v995
          %v1074 = vunpack.c.h.b16 %v995
          %v1075 = vunpack.c.l.b16 %v996
          %v1076 = vunpack.c.h.b16 %v996
          %v1077 = vunpack.c.l.b16 %v997
          %v1078 = vunpack.c.h.b16 %v997
          %v1079 = vunpack.c.l.b16 %v998
          %v1080 = vunpack.c.h.b16 %v998
          %v1081 = vunpack.c.l.b16 %v999
          %v1082 = vunpack.c.h.b16 %v999
          %v1083 = vunpack.c.l.b16 %v1000
          %v1084 = vunpack.c.h.b16 %v1000
          %v1085 = vpack.c.b16 %v1055, %v1053
          %v1086 = vpack.c.b16 %v1056, %v1054
          %v1087 = vpack.c.b16 %v1059, %v1057
          %v1088 = vpack.c.b16 %v1060, %v1058
          %v1089 = vpack.c.b16 %v1063, %v1061
          %v1090 = vpack.c.b16 %v1064, %v1062
          %v1091 = vpack.c.b16 %v1067, %v1065
          %v1092 = vpack.c.b16 %v1068, %v1066
          %v1093 = vpack.c.b16 %v1071, %v1069
          %v1094 = vpack.c.b16 %v1072, %v1070
          %v1095 = vpack.c.b16 %v1075, %v1073
          %v1096 = vpack.c.b16 %v1076, %v1074
          %v1097 = vpack.c.b16 %v1079, %v1077
          %v1098 = vpack.c.b16 %v1080, %v1078
          %v1099 = vpack.c.b16 %v1083, %v1081
          %v1100 = vpack.c.b16 %v1084, %v1082
          %v1149 = vunpack.c.l.b16 %v1001
          %v1150 = vunpack.c.l.b16 %v1002
          %v1151 = vunpack.c.l.b16 %v1003
          %v1152 = vunpack.c.l.b16 %v1004
          %v1153 = vunpack.c.l.b16 %v1005
          %v1154 = vunpack.c.l.b16 %v1006
          %v1155 = vunpack.c.l.b16 %v1007
          %v1156 = vunpack.c.l.b16 %v1008
          %v1157 = vunpack.c.l.b16 %v1009
          %v1158 = vunpack.c.l.b16 %v1010
          %v1159 = vunpack.c.l.b16 %v1011
          %v1160 = vunpack.c.l.b16 %v1012
          %v1161 = vunpack.c.l.b16 %v1013
          %v1162 = vunpack.c.l.b16 %v1014
          %v1163 = vunpack.c.l.b16 %v1015
          %v1164 = vunpack.c.l.b16 %v1016
          %v1165 = vunpack.c.l.b16 %v1017
          %v1166 = vunpack.c.l.b16 %v1018
          %v1167 = vunpack.c.l.b16 %v1019
          %v1168 = vunpack.c.l.b16 %v1020
          %v1169 = vunpack.c.l.b16 %v1021
          %v1170 = vunpack.c.l.b16 %v1022
          %v1171 = vunpack.c.l.b16 %v1023
          %v1172 = vunpack.c.l.b16 %v1024
          %v1173 = vunpack.c.l.b16 %v1025
          %v1174 = vunpack.c.l.b16 %v1026
          %v1175 = vunpack.c.l.b16 %v1027
          %v1176 = vunpack.c.l.b16 %v1028
          %v1177 = vunpack.c.l.b16 %v1029
          %v1178 = vunpack.c.l.b16 %v1030
          %v1179 = vunpack.c.l.b16 %v1031
          %v1180 = vunpack.c.l.b16 %v1032
          %v1181 = vpack.c.b16 %v1150, %v1149
          %v1182 = vpack.c.b16 %v1152, %v1151
          %v1183 = vpack.c.b16 %v1154, %v1153
          %v1184 = vpack.c.b16 %v1156, %v1155
          %v1185 = vpack.c.b16 %v1158, %v1157
          %v1186 = vpack.c.b16 %v1160, %v1159
          %v1187 = vpack.c.b16 %v1162, %v1161
          %v1188 = vpack.c.b16 %v1164, %v1163
          %v1189 = vpack.c.b16 %v1166, %v1165
          %v1190 = vpack.c.b16 %v1168, %v1167
          %v1191 = vpack.c.b16 %v1170, %v1169
          %v1192 = vpack.c.b16 %v1172, %v1171
          %v1193 = vpack.c.b16 %v1174, %v1173
          %v1194 = vpack.c.b16 %v1176, %v1175
          %v1195 = vpack.c.b16 %v1178, %v1177
          %v1196 = vpack.c.b16 %v1180, %v1179
          %1213 = vmatpush.bf16.msra.mxu0 %v1188
          %1214 = vmatpush.bf16.msra.mxu0 %v1187
          %1215 = vmatpush.bf16.msra.mxu0 %v1186
          %1216 = vmatpush.bf16.msra.mxu0 %v1185
          %1217 = vmatpush.bf16.msra.mxu0 %v1184
          %1218 = vmatpush.bf16.msra.mxu0 %v1183
          %1219 = vmatpush.bf16.msra.mxu0 %v1182
          %1220 = vmatpush.bf16.msra.mxu0 %v1181
          %1221 = vmatmul.bf16.gmra.mxu0 %v1085
          %v1222 = vpop.f32.mrf.mxu0
          %v1223 = vadd.f32 %v1035, %v1222
          %v1224 = vpop.f32.mrf.mxu0
          %v1225 = vadd.f32 %v1035, %v1224
          %1226 = vmatmul.bf16.gmra.mxu0 %v1087
          %v1227 = vpop.f32.mrf.mxu0
          %v1228 = vadd.f32 %v1035, %v1227
          %v1229 = vpop.f32.mrf.mxu0
          %v1230 = vadd.f32 %v1035, %v1229
          %1231 = vmatmul.bf16.gmra.mxu0 %v1089
          %v1232 = vpop.f32.mrf.mxu0
          %v1233 = vadd.f32 %v1035, %v1232
          %v1234 = vpop.f32.mrf.mxu0
          %v1235 = vadd.f32 %v1035, %v1234
          %1236 = vmatmul.bf16.gmra.mxu0 %v1091
          %v1237 = vpop.f32.mrf.mxu0
          %v1238 = vadd.f32 %v1035, %v1237
          %v1239 = vpop.f32.mrf.mxu0
          %v1240 = vadd.f32 %v1035, %v1239
          %1241 = vmatmul.bf16.gmra.mxu0 %v1093
          %v1242 = vpop.f32.mrf.mxu0
          %v1243 = vadd.f32 %v1035, %v1242
          %v1244 = vpop.f32.mrf.mxu0
          %v1245 = vadd.f32 %v1035, %v1244
          %1246 = vmatmul.bf16.gmra.mxu0 %v1095
          %v1247 = vpop.f32.mrf.mxu0
          %v1248 = vadd.f32 %v1035, %v1247
          %v1249 = vpop.f32.mrf.mxu0
          %v1250 = vadd.f32 %v1035, %v1249
          %1251 = vmatmul.bf16.gmra.mxu0 %v1097
          %v1252 = vpop.f32.mrf.mxu0
          %v1253 = vadd.f32 %v1035, %v1252
          %v1254 = vpop.f32.mrf.mxu0
          %v1255 = vadd.f32 %v1035, %v1254
          %1256 = vmatmul.bf16.gmra.mxu0 %v1099
          %v1257 = vpop.f32.mrf.mxu0
          %v1258 = vadd.f32 %v1035, %v1257
          %v1259 = vpop.f32.mrf.mxu0
          %v1260 = vadd.f32 %v1035, %v1259
          %1261 = vdwg.mxu0
          %1262 = vmatpush.bf16.msra.mxu0 %v1196
          %1263 = vmatpush.bf16.msra.mxu0 %v1195
          %1264 = vmatpush.bf16.msra.mxu0 %v1194
          %1265 = vmatpush.bf16.msra.mxu0 %v1193
          %1266 = vmatpush.bf16.msra.mxu0 %v1192
          %1267 = vmatpush.bf16.msra.mxu0 %v1191
          %1268 = vmatpush.bf16.msra.mxu0 %v1190
          %1269 = vmatpush.bf16.msra.mxu0 %v1189
          %1270 = vmatmul.bf16.gmra.mxu0 %v1086
          %v1271 = vpop.f32.mrf.mxu0
          %v1272 = vadd.f32 %v1223, %v1271
          %v1273 = vpop.f32.mrf.mxu0
          %v1274 = vadd.f32 %v1225, %v1273
          %1275 = vmatmul.bf16.gmra.mxu0 %v1088
          %v1276 = vpop.f32.mrf.mxu0
          %v1277 = vadd.f32 %v1228, %v1276
          %v1278 = vpop.f32.mrf.mxu0
          %v1279 = vadd.f32 %v1230, %v1278
          %1280 = vmatmul.bf16.gmra.mxu0 %v1090
          %v1281 = vpop.f32.mrf.mxu0
          %v1282 = vadd.f32 %v1233, %v1281
          %v1283 = vpop.f32.mrf.mxu0
          %v1284 = vadd.f32 %v1235, %v1283
          %1285 = vmatmul.bf16.gmra.mxu0 %v1092
          %v1286 = vpop.f32.mrf.mxu0
          %v1287 = vadd.f32 %v1238, %v1286
          %v1288 = vpop.f32.mrf.mxu0
          %v1289 = vadd.f32 %v1240, %v1288
          %1290 = vmatmul.bf16.gmra.mxu0 %v1094
          %v1291 = vpop.f32.mrf.mxu0
          %v1292 = vadd.f32 %v1243, %v1291
          %v1293 = vpop.f32.mrf.mxu0
          %v1294 = vadd.f32 %v1245, %v1293
          %1295 = vmatmul.bf16.gmra.mxu0 %v1096
          %v1296 = vpop.f32.mrf.mxu0
          %v1297 = vadd.f32 %v1248, %v1296
          %v1298 = vpop.f32.mrf.mxu0
          %v1299 = vadd.f32 %v1250, %v1298
          %1300 = vmatmul.bf16.gmra.mxu0 %v1098
          %v1301 = vpop.f32.mrf.mxu0
          %v1302 = vadd.f32 %v1253, %v1301
          %v1303 = vpop.f32.mrf.mxu0
          %v1304 = vadd.f32 %v1255, %v1303
          %1305 = vmatmul.bf16.gmra.mxu0 %v1100
          %v1306 = vpop.f32.mrf.mxu0
          %v1307 = vadd.f32 %v1258, %v1306
          %v1308 = vpop.f32.mrf.mxu0
          %v1309 = vadd.f32 %v1260, %v1308
          %1310 = vdwg.mxu0
          %v1311 = vmax.f32 %v1272, 0.0
          %v1312 = vmax.f32 %v1274, 0.0
          %v1313 = vmax.f32 %v1277, 0.0
          %v1314 = vmax.f32 %v1279, 0.0
          %v1315 = vmax.f32 %v1282, 0.0
          %v1316 = vmax.f32 %v1284, 0.0
          %v1317 = vmax.f32 %v1287, 0.0
          %v1318 = vmax.f32 %v1289, 0.0
          %v1319 = vmax.f32 %v1292, 0.0
          %v1320 = vmax.f32 %v1294, 0.0
          %v1321 = vmax.f32 %v1297, 0.0
          %v1322 = vmax.f32 %v1299, 0.0
          %v1323 = vmax.f32 %v1302, 0.0
          %v1324 = vmax.f32 %v1304, 0.0
          %v1325 = vmax.f32 %v1307, 0.0
          %v1326 = vmax.f32 %v1309, 0.0
          %v1327 = vpack.c.bf16 %v1311, %v1311
          %v1328 = vpack.c.bf16 %v1312, %v1312
          %v1329 = vpack.c.bf16 %v1313, %v1313
          %v1330 = vpack.c.bf16 %v1314, %v1314
          %v1331 = vpack.c.bf16 %v1315, %v1315
          %v1332 = vpack.c.bf16 %v1316, %v1316
          %v1333 = vpack.c.bf16 %v1317, %v1317
          %v1334 = vpack.c.bf16 %v1318, %v1318
          %v1335 = vpack.c.bf16 %v1319, %v1319
          %v1336 = vpack.c.bf16 %v1320, %v1320
          %v1337 = vpack.c.bf16 %v1321, %v1321
          %v1338 = vpack.c.bf16 %v1322, %v1322
          %v1339 = vpack.c.bf16 %v1323, %v1323
          %v1340 = vpack.c.bf16 %v1324, %v1324
          %v1341 = vpack.c.bf16 %v1325, %v1325
          %v1342 = vpack.c.bf16 %v1326, %v1326
          %1343 = vst [vmem:[%s391] sm:$0xf] %v1327
          %1344 = vst [vmem:[%s391 + $0x4] sm:$0xf] %v1328
          %1345 = vst [vmem:[%s391 + $0x8] sm:$0xf] %v1329
          %1346 = vst [vmem:[%s391 + $0xc] sm:$0xf] %v1330
          %1347 = vst [vmem:[%s391 + $0x10] sm:$0xf] %v1331
          %1348 = vst [vmem:[%s391 + $0x14] sm:$0xf] %v1332
          %1349 = vst [vmem:[%s391 + $0x18] sm:$0xf] %v1333
          %1350 = vst [vmem:[%s391 + $0x1c] sm:$0xf] %v1334
          %1351 = vst [vmem:[%s391 + $0x20] sm:$0xf] %v1335
          %1352 = vst [vmem:[%s391 + $0x24] sm:$0xf] %v1336
          %1353 = vst [vmem:[%s391 + $0x28] sm:$0xf] %v1337
          %1354 = vst [vmem:[%s391 + $0x2c] sm:$0xf] %v1338
          %1355 = vst [vmem:[%s391 + $0x30] sm:$0xf] %v1339
          %1356 = vst [vmem:[%s391 + $0x34] sm:$0xf] %v1340
          %1357 = vst [vmem:[%s391 + $0x38] sm:$0xf] %v1341
          %1358 = vst [vmem:[%s391 + $0x3c] sm:$0xf] %v1342
        $region87: #{tpu_custom_call.1} parent=62 // pred_fallthru
          _
        %s1359 = sand.u32 %s187, 1
        %s1360 = scalar_lea.sflag [#allocation7], %s1359
        %s1361 = sand.u32 %s187, 1
        %s1362 = smul.addr %s1361, 64
        %s1363 = scalar_lea.vmem [#allocation11], %s1362
        // Predicated region
        $region88: #{tpu_custom_call.1} parent=62 // pred_check
          %p1364 = pneg %p197
        $region89: #{tpu_custom_call.1} parent=62 // pred_check_branch
          %1366 = sbr.rel (%p1364) target = $region91
        $region90: #{tpu_custom_call.1} parent=62 // pred_region
          %s1367 = smul.u32 16, %s28
          %1369 = vsyncadd %s1360, 0
          %s1370 = smul.addr %s1367, 4
          %s1371 = scalar_lea.hbm %s6, %s1370
          %s1372 = sshll.u32 %s1363, 4
          %s1373 = int_to_ptr.vmem [resolvable:$true] %s1372
          %s1374 = sshll.u32 %s1371, 4
          %s1375 = int_to_ptr.hbm [resolvable:$true] %s1374
          %1380 = dma.vmem_to_hbm [thread:$0]  %s1373, 1024, %s1375, %s1360, 64, 64, 4
        $region91: #{tpu_custom_call.1} parent=62 // pred_fallthru
          _
      $region63: #{tpu_custom_call.1} parent=5 // pred_fallthru
        _
      %p1381 = scmp.le.s32.totalorder 2, %s19
      // Predicated region
      $region92: #{tpu_custom_call.1} parent=5 // pred_check
        %p1382 = pneg %p1381
      $region93: #{tpu_custom_call.1} parent=5 // pred_check_branch
        %1384 = sbr.rel (%p1382) target = $region95
      $region94: #{tpu_custom_call.1} parent=5 // pred_region
        %s1385 = ssub.s32 %s19, 2
        // Predicated region
        $region96: #{tpu_custom_call.1} parent=94 // pred_check
          %p1386 = pneg %p203
        $region97: #{tpu_custom_call.1} parent=94 // pred_check_branch
          %1388 = sbr.rel (%p1386) target = $region99
        $region98: #{tpu_custom_call.1} parent=94 // pred_region
          %s1389 = sand.u32 %s188, 1
          %s1390 = scalar_lea.sflag [#allocation7], %s1389
          %s1391 = sand.u32 %s188, 1
          %s1392 = smul.addr %s1391, 64
          %s1393 = scalar_lea.vmem [#allocation11], %s1392
          %1395 = dma.done %s1390, 1024
        $region99: #{tpu_custom_call.1} parent=94 // pred_fallthru
          _
      $region95: #{tpu_custom_call.1} parent=5 // pred_fallthru
        _
    $region6: #{tpu_custom_call.1} parent=1 // loop_footer
      %s23 = sadd.s32 1, %s19
    $region7: #{tpu_custom_call.1} parent=1 // loop_footer_branch
      %18 = sbr.rel target = $region3
    $region8: #{tpu_custom_call.1} parent=1 // loop_exit
      _
    %1396 = vsyncpa [#allocation6], 1
    %s1397 = scalar_lea.sflag [#allocation6], 1
    %1398 = vsyncpa %s1397, 1
    %1399 = vsyncpa [#allocation9], 1
    %s1400 = scalar_lea.sflag [#allocation9], 1
    %1401 = vsyncpa %s1400, 1
    %1402 = vsyncpa [#allocation7], 1
    %s1403 = scalar_lea.sflag [#allocation7], 1
    %1404 = vsyncpa %s1403, 1

</llo_original>
